<compile_context>
chip_gen: v7x
topology: tpu7x:2x2x1
jax: 0.10.0
libtpu: 0.0.40
codegen_flags: <defaults>
</compile_context>

<pallas_src>
import functools

import jax
import jax.numpy as jnp
from jax import lax
from jax.experimental import pallas as pl
from jax.experimental.pallas import tpu as pltpu


def _self_attention_kernel(x_ref, wq_ref, bq_ref, wkv_ref, bkv_ref, gamma_ref,
                           o_ref, q_sc, m_sc, l_sc, *, block_k, ckp):
    """Grid: (B, N // block_k).
    Axis 0: parallel over batch elements.  Axis 1: arbitrary reduction over
    key tiles (flash-style online softmax).

    Blocks (activations in (channels, tokens) = (sublane, lane) layout; batch
    dim squeezed):
      x_ref    : (C, N)        f32   full token slab (queries, keys/values
                                     sliced per tile, residual)
      wq_ref   : (Ckp, C)      bf16  query weight, zero-padded to Ckp rows
      bq_ref   : (Ckp, 1)      f32
      wkv_ref  : (Ckp + C, C)  bf16  stacked key (padded) + value weights
      bkv_ref  : (Ckp + C, 1)  f32
      gamma_ref: (1, 1)        f32   in SMEM
      o_ref    : (C, N)        f32   running numerator -> final output
    Scratch (persists across the key-tile axis):
      q_sc (Ckp, N) bf16, m_sc/l_sc (1, N) f32
    """
    kt = pl.program_id(1)
    last_kt = pl.num_programs(1) - 1

    dn_plain = (((1,), (0,)), ((), ()))   # lhs @ rhs
    dn_trans = (((0,), (0,)), ((), ()))   # lhs.T @ rhs (contract leading dims)

    # ---- once per batch element: project queries, reset softmax state ------
    @pl.when(kt == 0)
    def _():
        xq = x_ref[...].astype(jnp.bfloat16)                        # (C, N)
        q = lax.dot_general(wq_ref[...], xq, dn_plain,
                            preferred_element_type=jnp.float32)     # (Ckp, N)
        q_sc[...] = (q + bq_ref[...]).astype(jnp.bfloat16)
        m_sc[...] = jnp.full_like(m_sc, -jnp.inf)
        l_sc[...] = jnp.zeros_like(l_sc)
        o_ref[...] = jnp.zeros_like(o_ref)                          # numerator

    # ---- per key tile: fused K/V projection from the resident slab ---------
    start = pl.multiple_of(kt * block_k, block_k)
    xkv = x_ref[:, pl.ds(start, block_k)].astype(jnp.bfloat16)      # (C, tk)
    kv = lax.dot_general(wkv_ref[...], xkv, dn_plain,
                         preferred_element_type=jnp.float32) + bkv_ref[...]
    k = kv[:ckp, :]                                                 # (Ckp, tk)
    v = kv[ckp:, :]                                                 # (C, tk)

    # transposed energy for this tile: e[j, i] = <k_j, q_i>  -> (tk, N);
    # zero pad rows of k and q_sc contribute nothing to the contraction.
    e = lax.dot_general(k.astype(jnp.bfloat16), q_sc[...], dn_trans,
                        preferred_element_type=jnp.float32)

    m_prev = m_sc[...]                                              # (1, N)
    m_new = jnp.maximum(m_prev, jnp.max(e, axis=0, keepdims=True))
    alpha = jnp.exp(m_prev - m_new)                                 # (1, N)
    p = jnp.exp(e - m_new)                                          # (tk, N)

    # Note: if the bundle shows the XLU as the binding slot, this sum can be
    # moved to the (nearly idle) MXU as ones((1, tk)) @ p.
    l_sc[...] = alpha * l_sc[...] + jnp.sum(p, axis=0, keepdims=True)
    pv = lax.dot_general(v.astype(jnp.bfloat16), p.astype(jnp.bfloat16),
                         dn_plain, preferred_element_type=jnp.float32)
    o_ref[...] = alpha * o_ref[...] + pv                            # (C, N)
    m_sc[...] = m_new

    # ---- after last key tile: normalize, scale by gamma, add residual ------
    @pl.when(kt == last_kt)
    def _():
        inv_l = pl.reciprocal(l_sc[...], approx=True)               # (1, N)
        g = gamma_ref[0, 0]
        o_ref[...] = (g * (o_ref[...] * inv_l) + x_ref[...]).astype(o_ref.dtype)


def self_attention_pallas(x_nchw, wq, bq, wk, bk, wv, bv, gamma, *,
                          block_k=None):
    """x_nchw: (B, C, H, W) f32.  Parameters in PyTorch Conv2d layout:
    wq/wk: (C//8, C), wv: (C, C), biases (Cout,), gamma: (1,)."""
    B, C, H, W = x_nchw.shape
    N = H * W
    Ck = wq.shape[0]
    Ckp = max(8, ((Ck + 7) // 8) * 8)     # sublane-aligned padded q/k channels

    if block_k is None:                   # key-tile size (lane axis)
        if N % 256 == 0 and N >= 256:
            block_k = 256                 # fills 256-deep MXU on v6e/v7x
        elif N % 128 == 0:
            block_k = 128
        else:
            block_k = N
    assert N % block_k == 0

    # NCHW -> (B, C, N) is a pure metadata reshape; no HBM transpose.
    x_bcn = x_nchw.reshape(B, C, N).astype(jnp.float32)

    # bf16 MXU weights (query padded to Ckp rows, key padded + value stacked);
    # biases stay f32 and are added post-matmul.  Zero pad rows stay zero.
    wq_p = (jnp.zeros((Ckp, C), jnp.float32).at[:Ck].set(wq)
            .astype(jnp.bfloat16))
    bq_p = jnp.zeros((Ckp, 1), jnp.float32).at[:Ck, 0].set(bq)
    wkv = (jnp.zeros((Ckp + C, C), jnp.float32)
           .at[:Ck].set(wk).at[Ckp:].set(wv).astype(jnp.bfloat16))
    bkv = (jnp.zeros((Ckp + C, 1), jnp.float32)
           .at[:Ck, 0].set(bk).at[Ckp:, 0].set(bv))
    gamma2 = jnp.reshape(gamma, (1, 1)).astype(jnp.float32)

    grid = (B, N // block_k)

    grid_spec = pltpu.PrefetchScalarGridSpec(
        num_scalar_prefetch=0,
        grid=grid,
        in_specs=[
            # full token slab; resident across key tiles (queries, per-tile
            # K/V slices via pl.ds, residual)
            pl.BlockSpec((pl.Squeezed(), C, N), lambda b, kt: (b, 0, 0)),
            pl.BlockSpec((Ckp, C), lambda b, kt: (0, 0)),        # wq (padded)
            pl.BlockSpec((Ckp, 1), lambda b, kt: (0, 0)),        # bq (padded)
            pl.BlockSpec((Ckp + C, C), lambda b, kt: (0, 0)),    # wk|wv stacked
            pl.BlockSpec((Ckp + C, 1), lambda b, kt: (0, 0)),    # bk|bv stacked
            pl.BlockSpec(memory_space=pltpu.MemorySpace.SMEM),   # gamma scalar
        ],
        out_specs=pl.BlockSpec((pl.Squeezed(), C, N), lambda b, kt: (b, 0, 0)),
        scratch_shapes=[
            pltpu.VMEM((Ckp, N), jnp.bfloat16),    # projected queries
            pltpu.VMEM((1, N), jnp.float32),       # running max
            pltpu.VMEM((1, N), jnp.float32),       # running denom
        ],
    )

    # VMEM budget from actual block sizes (double-buffered x and out slabs,
    # scratch, weights), with headroom; capped at v7x's 64 MiB.
    slab_bytes = C * N * 4
    vmem_est = (2 * slab_bytes                       # x slab, 2x buffered
                + 2 * slab_bytes                     # out slab, 2x buffered
                + Ckp * N * 2                        # q scratch (bf16)
                + 2 * 8 * N * 4                      # m/l (sublane-padded)
                + 2 * ((Ckp + Ckp + C) * C * 2       # weights, 2x buffered
                       + (2 * Ckp + C) * 4))         # biases
    vmem_limit = min(64 * 1024 * 1024,
                     max(4 * 1024 * 1024, int(vmem_est * 1.5) + (1 << 20)))

    kernel = functools.partial(_self_attention_kernel,
                               block_k=block_k, ckp=Ckp)

    out_bcn = pl.pallas_call(
        kernel,
        out_shape=jax.ShapeDtypeStruct((B, C, N), jnp.float32),
        grid_spec=grid_spec,
        compiler_params=pltpu.CompilerParams(
            dimension_semantics=("parallel", "arbitrary"),
            vmem_limit_bytes=vmem_limit),
    )(x_bcn, wq_p, bq_p, wkv, bkv, gamma2)

    return out_bcn.reshape(B, C, H, W)


def self_attention_ref(x, wq, bq, wk, bk, wv, bv, gamma):
    """Pure-JAX reference mirroring the PyTorch forward exactly (f32)."""
    B, C, H, W = x.shape
    N = H * W
    x_bcn = x.reshape(B, C, N)
    q = jnp.einsum("kc,bcn->bkn", wq, x_bcn) + bq[None, :, None]   # (B, Ck, N)
    k = jnp.einsum("kc,bcn->bkn", wk, x_bcn) + bk[None, :, None]   # (B, Ck, N)
    v = jnp.einsum("dc,bcn->bdn", wv, x_bcn) + bv[None, :, None]   # (B, C, N)
    energy = jnp.einsum("bki,bkj->bij", q, k)                      # (B, N, N)
    attn = jax.nn.softmax(energy, axis=2)
    out = jnp.einsum("bcj,bij->bci", v, attn)                      # (B, C, N)
    return gamma.reshape(()) * out.reshape(B, C, H, W) + x


if __name__ == "__main__":
    B, C, H, W = 2, 32, 16, 16        # N = 256 tokens, Ck = C // 8 = 4
    Ck = C // 8

    key = jax.random.PRNGKey(0)
    k_x, k_wq, k_bq, k_wk, k_bk, k_wv, k_bv = jax.random.split(key, 7)

    x = jax.random.normal(k_x, (B, C, H, W), dtype=jnp.float32)

    # Parameters in PyTorch Conv2d layout: weight (out, in), bias (out,).
    wq = 0.1 * jax.random.normal(k_wq, (Ck, C), dtype=jnp.float32)
    bq = 0.1 * jax.random.normal(k_bq, (Ck,), dtype=jnp.float32)
    wk = 0.1 * jax.random.normal(k_wk, (Ck, C), dtype=jnp.float32)
    bk = 0.1 * jax.random.normal(k_bk, (Ck,), dtype=jnp.float32)
    wv = 0.1 * jax.random.normal(k_wv, (C, C), dtype=jnp.float32)
    bv = 0.1 * jax.random.normal(k_bv, (C,), dtype=jnp.float32)
    # Module __init__ sets gamma = 0; use a nonzero value so the attention
    # path actually contributes to the checked output.
    gamma = jnp.full((1,), 0.5, dtype=jnp.float32)

    out = jax.block_until_ready(
        self_attention_pallas(x, wq, bq, wk, bk, wv, bv, gamma))

    ref = self_attention_ref(x, wq, bq, wk, bk, wv, bv, gamma)
    assert out.shape == (B, C, H, W)
    # bf16 MXU operands + approx reciprocal -> looser tolerance than pure-f32.
    assert jnp.allclose(out, ref, atol=2e-2, rtol=2e-2), "mismatch vs reference"

    print("KERNEL_OK")
</pallas_src>

<mosaic_0001>
module attributes {stable_mosaic.version = 11 : i64} {
  func.func @_self_attention_kernel(%arg0: i32, %arg1: i32, %arg2: memref<1x32x256xf32, #tpu.memory_space<vmem>>, %arg3: memref<8x32xbf16, #tpu.memory_space<vmem>>, %arg4: memref<8x1xf32, #tpu.memory_space<vmem>>, %arg5: memref<40x32xbf16, #tpu.memory_space<vmem>>, %arg6: memref<40x1xf32, #tpu.memory_space<vmem>>, %arg7: memref<1x1xf32, #tpu.memory_space<smem>>, %arg8: memref<1x32x256xf32, #tpu.memory_space<vmem>>, %arg9: memref<8x256xbf16, #tpu.memory_space<vmem>>, %arg10: memref<1x256xf32, #tpu.memory_space<vmem>>, %arg11: memref<1x256xf32, #tpu.memory_space<vmem>>) attributes {dimension_semantics = [#tpu.dimension_semantics<parallel>, #tpu.dimension_semantics<arbitrary>], iteration_bounds = array<i64: 2, 1>, scalar_prefetch = 0 : i64, scratch_operands = 3 : i64, tpu.core_type = #tpu.core_type<tc>, window_params = [{transform_indices = @transform_0, window_bounds = array<i64: 1, 32, 256>}, {pipeline_mode = #tpu.pipeline_mode<synchronous>, transform_indices = @transform_1, window_bounds = array<i64: 8, 32>}, {pipeline_mode = #tpu.pipeline_mode<synchronous>, transform_indices = @transform_2, window_bounds = array<i64: 8, 1>}, {pipeline_mode = #tpu.pipeline_mode<synchronous>, transform_indices = @transform_3, window_bounds = array<i64: 40, 32>}, {pipeline_mode = #tpu.pipeline_mode<synchronous>, transform_indices = @transform_4, window_bounds = array<i64: 40, 1>}, {transform_indices = @transform_5, window_bounds = array<i64: 1, 1>}, {transform_indices = @transform_6, window_bounds = array<i64: 1, 32, 256>}]} {
    %c0_i32 = arith.constant 0 : i32
    %0 = arith.cmpi eq, %arg1, %c0_i32 : i32
    %1 = arith.extui %0 : i1 to i32
    %c0_i32_0 = arith.constant 0 : i32
    %2 = arith.cmpi ne, %1, %c0_i32_0 : i32
    scf.if %2 {
      %c0_28 = arith.constant 0 : index
      %c0_29 = arith.constant 0 : index
      %c0_30 = arith.constant 0 : index
      %49 = vector.load %arg2[%c0_28, %c0_29, %c0_30] : memref<1x32x256xf32, #tpu.memory_space<vmem>>, vector<1x32x256xf32>
      %50 = vector.shape_cast %49 : vector<1x32x256xf32> to vector<32x256xf32>
      %51 = arith.truncf %50 : vector<32x256xf32> to vector<32x256xbf16>
      %c0_31 = arith.constant 0 : index
      %c0_32 = arith.constant 0 : index
      %52 = vector.load %arg3[%c0_31, %c0_32] : memref<8x32xbf16, #tpu.memory_space<vmem>>, vector<8x32xbf16>
      %cst_33 = arith.constant dense<0.000000e+00> : vector<8x256xf32>
      %53 = tpu.matmul %52, %51, %cst_33 {dimension_numbers = #tpu.dot_dimension_numbers<[1], [0], [0], [1], [0, 0, 1, 1], [], []>} : vector<8x32xbf16>, vector<32x256xbf16>, vector<8x256xf32> -> vector<8x256xf32>
      %c0_34 = arith.constant 0 : index
      %c0_35 = arith.constant 0 : index
      %54 = vector.load %arg4[%c0_34, %c0_35] : memref<8x1xf32, #tpu.memory_space<vmem>>, vector<8x1xf32>
      %55 = vector.broadcast %54 : vector<8x1xf32> to vector<8x256xf32>
      %56 = arith.addf %53, %55 : vector<8x256xf32>
      %57 = arith.truncf %56 : vector<8x256xf32> to vector<8x256xbf16>
      %c0_36 = arith.constant 0 : index
      %c0_37 = arith.constant 0 : index
      %58 = vector.load %arg9[%c0_36, %c0_37] : memref<8x256xbf16, #tpu.memory_space<vmem>>, vector<8x256xbf16>
      tpu.vector_store %arg9[%c0_36, %c0_37], %57 {strides = array<i32>} : memref<8x256xbf16, #tpu.memory_space<vmem>>, vector<8x256xbf16>,
      %cst_38 = arith.constant 0xFF800000 : f32
      %59 = vector.broadcast %cst_38 : f32 to vector<1x256xf32>
      %c0_39 = arith.constant 0 : index
      %c0_40 = arith.constant 0 : index
      %60 = vector.load %arg10[%c0_39, %c0_40] : memref<1x256xf32, #tpu.memory_space<vmem>>, vector<1x256xf32>
      tpu.vector_store %arg10[%c0_39, %c0_40], %59 {strides = array<i32>} : memref<1x256xf32, #tpu.memory_space<vmem>>, vector<1x256xf32>,
      %cst_41 = arith.constant 0.000000e+00 : f32
      %61 = vector.broadcast %cst_41 : f32 to vector<1x256xf32>
      %c0_42 = arith.constant 0 : index
      %c0_43 = arith.constant 0 : index
      %62 = vector.load %arg11[%c0_42, %c0_43] : memref<1x256xf32, #tpu.memory_space<vmem>>, vector<1x256xf32>
      tpu.vector_store %arg11[%c0_42, %c0_43], %61 {strides = array<i32>} : memref<1x256xf32, #tpu.memory_space<vmem>>, vector<1x256xf32>,
      %cst_44 = arith.constant 0.000000e+00 : f32
      %63 = vector.broadcast %cst_44 : f32 to vector<32x256xf32>
      %c0_45 = arith.constant 0 : index
      %c0_46 = arith.constant 0 : index
      %c0_47 = arith.constant 0 : index
      %64 = vector.load %arg8[%c0_45, %c0_46, %c0_47] : memref<1x32x256xf32, #tpu.memory_space<vmem>>, vector<1x32x256xf32>
      %65 = vector.shape_cast %64 : vector<1x32x256xf32> to vector<32x256xf32>
      %66 = vector.shape_cast %63 : vector<32x256xf32> to vector<1x32x256xf32>
      tpu.vector_store %arg8[%c0_45, %c0_46, %c0_47], %66 {strides = array<i32>} : memref<1x32x256xf32, #tpu.memory_space<vmem>>, vector<1x32x256xf32>,
    } else {
    }
    %c256_i32 = arith.constant 256 : i32
    %3 = arith.muli %arg1, %c256_i32 : i32
    %4 = tpu.assume_multiple %3, 256 : i32
    %c0 = arith.constant 0 : index
    %c0_1 = arith.constant 0 : index
    %5 = arith.index_cast %4 : i32 to index
    %6 = vector.load %arg2[%c0, %c0_1, %5] : memref<1x32x256xf32, #tpu.memory_space<vmem>>, vector<1x32x256xf32>
    %7 = vector.shape_cast %6 : vector<1x32x256xf32> to vector<32x256xf32>
    %8 = arith.truncf %7 : vector<32x256xf32> to vector<32x256xbf16>
    %c0_2 = arith.constant 0 : index
    %c0_3 = arith.constant 0 : index
    %9 = vector.load %arg5[%c0_2, %c0_3] : memref<40x32xbf16, #tpu.memory_space<vmem>>, vector<40x32xbf16>
    %cst = arith.constant dense<0.000000e+00> : vector<40x256xf32>
    %10 = tpu.matmul %9, %8, %cst {dimension_numbers = #tpu.dot_dimension_numbers<[1], [0], [0], [1], [0, 0, 1, 1], [], []>} : vector<40x32xbf16>, vector<32x256xbf16>, vector<40x256xf32> -> vector<40x256xf32>
    %c0_4 = arith.constant 0 : index
    %c0_5 = arith.constant 0 : index
    %11 = vector.load %arg6[%c0_4, %c0_5] : memref<40x1xf32, #tpu.memory_space<vmem>>, vector<40x1xf32>
    %12 = vector.broadcast %11 : vector<40x1xf32> to vector<40x256xf32>
    %13 = arith.addf %10, %12 : vector<40x256xf32>
    %14 = vector.extract_strided_slice %13 {offsets = [0, 0], sizes = [8, 256], strides = [1, 1]} : vector<40x256xf32> to vector<8x256xf32>
    %15 = vector.extract_strided_slice %13 {offsets = [8, 0], sizes = [32, 256], strides = [1, 1]} : vector<40x256xf32> to vector<32x256xf32>
    %16 = arith.truncf %14 : vector<8x256xf32> to vector<8x256xbf16>
    %c0_6 = arith.constant 0 : index
    %c0_7 = arith.constant 0 : index
    %17 = vector.load %arg9[%c0_6, %c0_7] : memref<8x256xbf16, #tpu.memory_space<vmem>>, vector<8x256xbf16>
    %cst_8 = arith.constant dense<0.000000e+00> : vector<256x256xf32>
    %18 = tpu.matmul %16, %17, %cst_8 {dimension_numbers = #tpu.dot_dimension_numbers<[0], [0], [1], [1], [0, 1, 1, 1], [], []>} : vector<8x256xbf16>, vector<8x256xbf16>, vector<256x256xf32> -> vector<256x256xf32>
    %c0_9 = arith.constant 0 : index
    %c0_10 = arith.constant 0 : index
    %19 = vector.load %arg10[%c0_9, %c0_10] : memref<1x256xf32, #tpu.memory_space<vmem>>, vector<1x256xf32>
    %cst_11 = arith.constant dense<0xFF800000> : vector<256xf32>
    %20 = vector.multi_reduction <maximumf>, %18, %cst_11 [0] : vector<256x256xf32> to vector<256xf32>
    %21 = vector.shape_cast %20 : vector<256xf32> to vector<1x256xf32>
    %22 = arith.maximumf %19, %21 : vector<1x256xf32>
    %23 = arith.subf %19, %22 : vector<1x256xf32>
    %24 = math.exp %23 : vector<1x256xf32>
    %25 = vector.broadcast %22 : vector<1x256xf32> to vector<256x256xf32>
    %26 = arith.subf %18, %25 : vector<256x256xf32>
    %27 = math.exp %26 : vector<256x256xf32>
    %c0_12 = arith.constant 0 : index
    %c0_13 = arith.constant 0 : index
    %28 = vector.load %arg11[%c0_12, %c0_13] : memref<1x256xf32, #tpu.memory_space<vmem>>, vector<1x256xf32>
    %29 = arith.mulf %24, %28 : vector<1x256xf32>
    %cst_14 = arith.constant dense<0.000000e+00> : vector<256xf32>
    %30 = vector.multi_reduction <add>, %27, %cst_14 [0] : vector<256x256xf32> to vector<256xf32>
    %31 = vector.shape_cast %30 : vector<256xf32> to vector<1x256xf32>
    %32 = arith.addf %29, %31 : vector<1x256xf32>
    %c0_15 = arith.constant 0 : index
    %c0_16 = arith.constant 0 : index
    %33 = vector.load %arg11[%c0_15, %c0_16] : memref<1x256xf32, #tpu.memory_space<vmem>>, vector<1x256xf32>
    tpu.vector_store %arg11[%c0_15, %c0_16], %32 {strides = array<i32>} : memref<1x256xf32, #tpu.memory_space<vmem>>, vector<1x256xf32>,
    %34 = arith.truncf %15 : vector<32x256xf32> to vector<32x256xbf16>
    %35 = arith.truncf %27 : vector<256x256xf32> to vector<256x256xbf16>
    %cst_17 = arith.constant dense<0.000000e+00> : vector<32x256xf32>
    %36 = tpu.matmul %34, %35, %cst_17 {dimension_numbers = #tpu.dot_dimension_numbers<[1], [0], [0], [1], [0, 0, 1, 1], [], []>} : vector<32x256xbf16>, vector<256x256xbf16>, vector<32x256xf32> -> vector<32x256xf32>
    %c0_18 = arith.constant 0 : index
    %c0_19 = arith.constant 0 : index
    %c0_20 = arith.constant 0 : index
    %37 = vector.load %arg8[%c0_18, %c0_19, %c0_20] : memref<1x32x256xf32, #tpu.memory_space<vmem>>, vector<1x32x256xf32>
    %38 = vector.shape_cast %37 : vector<1x32x256xf32> to vector<32x256xf32>
    %39 = vector.broadcast %24 : vector<1x256xf32> to vector<32x256xf32>
    %40 = arith.mulf %39, %38 : vector<32x256xf32>
    %41 = arith.addf %40, %36 : vector<32x256xf32>
    %c0_21 = arith.constant 0 : index
    %c0_22 = arith.constant 0 : index
    %c0_23 = arith.constant 0 : index
    %42 = vector.load %arg8[%c0_21, %c0_22, %c0_23] : memref<1x32x256xf32, #tpu.memory_space<vmem>>, vector<1x32x256xf32>
    %43 = vector.shape_cast %42 : vector<1x32x256xf32> to vector<32x256xf32>
    %44 = vector.shape_cast %41 : vector<32x256xf32> to vector<1x32x256xf32>
    tpu.vector_store %arg8[%c0_21, %c0_22, %c0_23], %44 {strides = array<i32>} : memref<1x32x256xf32, #tpu.memory_space<vmem>>, vector<1x32x256xf32>,
    %c0_24 = arith.constant 0 : index
    %c0_25 = arith.constant 0 : index
    %45 = vector.load %arg10[%c0_24, %c0_25] : memref<1x256xf32, #tpu.memory_space<vmem>>, vector<1x256xf32>
    tpu.vector_store %arg10[%c0_24, %c0_25], %22 {strides = array<i32>} : memref<1x256xf32, #tpu.memory_space<vmem>>, vector<1x256xf32>,
    %c0_i32_26 = arith.constant 0 : i32
    %46 = arith.cmpi eq, %arg1, %c0_i32_26 : i32
    %47 = arith.extui %46 : i1 to i32
    %c0_i32_27 = arith.constant 0 : i32
    %48 = arith.cmpi ne, %47, %c0_i32_27 : i32
    scf.if %48 {
      %c0_28 = arith.constant 0 : index
      %c0_29 = arith.constant 0 : index
      %49 = vector.load %arg11[%c0_28, %c0_29] : memref<1x256xf32, #tpu.memory_space<vmem>>, vector<1x256xf32>
      %50 = tpu.reciprocal %49 {approx = true} : vector<1x256xf32> -> vector<1x256xf32>
      %c0_30 = arith.constant 0 : index
      %c0_31 = arith.constant 0 : index
      %51 = memref.load %arg7[%c0_30, %c0_31] : memref<1x1xf32, #tpu.memory_space<smem>>
      %c0_32 = arith.constant 0 : index
      %c0_33 = arith.constant 0 : index
      %c0_34 = arith.constant 0 : index
      %52 = vector.load %arg8[%c0_32, %c0_33, %c0_34] : memref<1x32x256xf32, #tpu.memory_space<vmem>>, vector<1x32x256xf32>
      %53 = vector.shape_cast %52 : vector<1x32x256xf32> to vector<32x256xf32>
      %54 = vector.broadcast %50 : vector<1x256xf32> to vector<32x256xf32>
      %55 = arith.mulf %53, %54 : vector<32x256xf32>
      %56 = vector.broadcast %51 : f32 to vector<32x256xf32>
      %57 = arith.mulf %56, %55 : vector<32x256xf32>
      %c0_35 = arith.constant 0 : index
      %c0_36 = arith.constant 0 : index
      %c0_37 = arith.constant 0 : index
      %58 = vector.load %arg2[%c0_35, %c0_36, %c0_37] : memref<1x32x256xf32, #tpu.memory_space<vmem>>, vector<1x32x256xf32>
      %59 = vector.shape_cast %58 : vector<1x32x256xf32> to vector<32x256xf32>
      %60 = arith.addf %57, %59 : vector<32x256xf32>
      %c0_38 = arith.constant 0 : index
      %c0_39 = arith.constant 0 : index
      %c0_40 = arith.constant 0 : index
      %61 = vector.load %arg8[%c0_38, %c0_39, %c0_40] : memref<1x32x256xf32, #tpu.memory_space<vmem>>, vector<1x32x256xf32>
      %62 = vector.shape_cast %61 : vector<1x32x256xf32> to vector<32x256xf32>
      %63 = vector.shape_cast %60 : vector<32x256xf32> to vector<1x32x256xf32>
      tpu.vector_store %arg8[%c0_38, %c0_39, %c0_40], %63 {strides = array<i32>} : memref<1x32x256xf32, #tpu.memory_space<vmem>>, vector<1x32x256xf32>,
    } else {
    }
    return
  }
  func.func @transform_0(%arg0: i32, %arg1: i32) -> (i32, i32, i32) {
    %c0_i32 = arith.constant 0 : i32
    %c0_i32_0 = arith.constant 0 : i32
    %c0_i32_1 = arith.constant 0 : i32
    return %arg0, %c0_i32, %c0_i32_0 : i32, i32, i32
  }
  func.func @transform_1(%arg0: i32, %arg1: i32) -> (i32, i32) {
    %c0_i32 = arith.constant 0 : i32
    %c0_i32_0 = arith.constant 0 : i32
    %c0_i32_1 = arith.constant 0 : i32
    return %c0_i32, %c0_i32_0 : i32, i32
  }
  func.func @transform_2(%arg0: i32, %arg1: i32) -> (i32, i32) {
    %c0_i32 = arith.constant 0 : i32
    %c0_i32_0 = arith.constant 0 : i32
    %c0_i32_1 = arith.constant 0 : i32
    return %c0_i32, %c0_i32_0 : i32, i32
  }
  func.func @transform_3(%arg0: i32, %arg1: i32) -> (i32, i32) {
    %c0_i32 = arith.constant 0 : i32
    %c0_i32_0 = arith.constant 0 : i32
    %c0_i32_1 = arith.constant 0 : i32
    return %c0_i32, %c0_i32_0 : i32, i32
  }
  func.func @transform_4(%arg0: i32, %arg1: i32) -> (i32, i32) {
    %c0_i32 = arith.constant 0 : i32
    %c0_i32_0 = arith.constant 0 : i32
    %c0_i32_1 = arith.constant 0 : i32
    return %c0_i32, %c0_i32_0 : i32, i32
  }
  func.func @transform_5(%arg0: i32, %arg1: i32) -> (i32, i32) {
    %c0_i32 = arith.constant 0 : i32
    %c0_i32_0 = arith.constant 0 : i32
    %c0_i32_1 = arith.constant 0 : i32
    return %c0_i32, %c0_i32_0 : i32, i32
  }
  func.func @transform_6(%arg0: i32, %arg1: i32) -> (i32, i32, i32) {
    %c0_i32 = arith.constant 0 : i32
    %c0_i32_0 = arith.constant 0 : i32
    %c0_i32_1 = arith.constant 0 : i32
    return %arg0, %c0_i32, %c0_i32_0 : i32, i32, i32
  }
}

</mosaic_0001>

<llo_original>
// kernel: tpu_custom_call.1
$region0: #{tpu_custom_call.1}
  #allocation0 [shape = 'u32[]', space=smem, size = 0x4, offset = 0x4, fixed_abs, tag = 'smem constant byte address 0x4 - core index']
  #allocation1 [shape = 'u32[144,128]{1,0:T(1,128)}', space=vmem, size = 0x12000, scoped, tag = 'internal scratch']
  #allocation2 [shape = 'bf16[8,256]{1,0:T(8,128)(2,1)}', space=vmem, size = 0x1000, scoped, tag = 'scratch operand']
  #allocation3 [shape = 'f32[1,256]{1,0:T(1,128)}', space=vmem, size = 0x400, scoped, tag = 'scratch operand']
  #allocation4 [shape = 'f32[1,256]{1,0:T(1,128)}', space=vmem, size = 0x400, scoped, tag = 'scratch operand']
  #allocation5 [shape = 'f32[1,1]{1,0:T(1,128)S(6)}', space=smem, size = 0x200, scoped, tag = 'scoped memory for tpu_custom_call.1']
  %s0 = inlined_call_operand.hbm [shape: f32[2,32,256], index: 0, kind: input, shape index: {}]
  %s1 = inlined_call_operand.vmem [shape: bf16[8,32], index: 1, kind: input, shape index: {}]
  %s2 = inlined_call_operand.vmem [shape: f32[8,1], index: 2, kind: input, shape index: {}]
  %s3 = inlined_call_operand.vmem [shape: bf16[40,32], index: 3, kind: input, shape index: {}]
  %s4 = inlined_call_operand.vmem [shape: f32[40,1], index: 4, kind: input, shape index: {}]
  %s5 = inlined_call_operand.<no memory space> [shape: f32[1,1], index: 5, kind: input, shape index: {}]
  %s6 = inlined_call_operand.hbm [shape: f32[2,32,256], index: 6, kind: output, shape index: {}]
  %s7 = sld [smem:[#allocation0]]
  $region69: #{tpu_custom_call.1} parent=0
    _
  %s9 = ssub.s32 1, %s7
  %s10 = scalar_select 0, %s9, %s7
  %11 = sst [smem:[#allocation5]] %s5
  $region1: #{tpu_custom_call.1} parent=0
    #allocation6 [shape = 'u8[65536]{0}', space=vmem, size = 0x10000, scoped, tag = 'input window, operand 0']
    #allocation7 [shape = 's32[2]{0}', space=sflag, size = 0x8, scoped, tag = 'scoped memory for tpu_custom_call.1']
    #allocation8 [shape = 's32[2]{0}', space=sflag, size = 0x8, scoped, tag = 'scoped memory for tpu_custom_call.1']
    #allocation9 [shape = 'u8[65536]{0}', space=vmem, size = 0x10000, scoped, tag = 'output window, operand 0']
    %12 = vsyncpa [#allocation7], 0
    %s13 = scalar_lea.sflag [#allocation7], 1
    %14 = vsyncpa %s13, 0
    %15 = vsyncpa [#allocation8], 0
    %s16 = scalar_lea.sflag [#allocation8], 1
    %17 = vsyncpa %s16, 0
    loop: start=0, step=1, limit=4
    $region2: #{tpu_custom_call.1} parent=1 // loop_pre_header
      _
    $region3: #{tpu_custom_call.1} parent=1 // loop_header
      %s19 = sphi 0, %s23
      %p20 = scmp.ge.s32.totalorder %s19, 4
      %s26 = sphi 0, %s38
      %s27 = sphi 0, %s34
      %s28 = sphi 0, %s26
      %s29 = sphi 0, %s27
      %s30 = sphi 0, %s28
      %s31 = sphi 0, %s29
      %s41 = sphi 0, %s43
      %s44 = sphi 0, %s41
      %s45 = sphi 0, %s44
      %s61 = sphi 0, %s45
      %s65 = sphi 0, %s65
      %s67 = sphi 0, %s65
      %s68 = sphi 0, %s67
      %s82 = sphi 0, %s68
      %s86 = sphi 0, %s86
      %s88 = sphi 0, %s86
      %s89 = sphi 0, %s88
      %s103 = sphi 0, %s89
      %s107 = sphi 0, %s107
      %s109 = sphi 0, %s107
      %s110 = sphi 0, %s109
      %s124 = sphi 0, %s110
      %s128 = sphi 0, %s128
      %s130 = sphi 0, %s128
      %s131 = sphi 0, %s130
      %s145 = sphi 0, %s131
      %s149 = sphi 0, %s149
      %s151 = sphi 0, %s149
      %s152 = sphi 0, %s151
      %s166 = sphi 0, %s152
      %s172 = sphi 0, %s174
      %s175 = sphi 0, %s172
      %s176 = sphi 0, %s175
      %s192 = sphi 0, %s176
    $region4: #{tpu_custom_call.1} parent=1 // loop_header_branch
      %22 = sbr.rel (%p20) target = $region8
    $region5: #{tpu_custom_call.1} parent=1 // loop_body
      %s24 = ssub.s32 %s19, 1
      %s25 = ssub.s32 %s19, 2
      %s32 = sadd.s32 1, %s27
      %p33 = scmp.ge.s32.totalorder %s32, 1
      %s34 = scalar_select %p33, 0, %s32
      %s35 = sadd.s32 1, %s26
      %s36 = scalar_select %p33, %s35, %s26
      %p37 = scmp.ge.s32.totalorder %s36, 2
      %s38 = scalar_select %p37, 0, %s36
      %s39 = ssub.s32 %s26, %s38
      %p40 = scmp.eq.s32.totalorder %s39, 0
      %s42 = sadd.s32 %s41, 1
      %s43 = scalar_select %p40, %s41, %s42
      %p46 = pneg %p40
      %p47 = scmp.eq.s32.totalorder %s19, 1
      %p48 = por %p46, %p47
      %p49 = scmp.ne.s32.totalorder %s41, %s44
      %p50 = scmp.eq.s32.totalorder %s19, 0
      %p51 = por %p49, %p50
      %p52 = scmp.ne.s32.totalorder %s41, %s44
      %p53 = scmp.eq.s32.totalorder %s24, 1
      %p54 = por %p52, %p53
      %p55 = scmp.ne.s32.totalorder %s44, %s45
      %p56 = scmp.eq.s32.totalorder %s24, 0
      %p57 = por %p55, %p56
      %p58 = scmp.ne.s32.totalorder %s44, %s45
      %p59 = scmp.eq.s32.totalorder %s25, 1
      %p60 = por %p58, %p59
      %p62 = scmp.ne.s32.totalorder %s45, %s61
      %p63 = scmp.eq.s32.totalorder %s25, 0
      %p64 = por %p62, %p63
      %s66 = sadd.s32 %s65, 1
      %p69 = scmp.eq.s32.totalorder %s19, 1
      %p70 = scmp.ne.s32.totalorder %s65, %s67
      %p71 = scmp.eq.s32.totalorder %s19, 0
      %p72 = por %p70, %p71
      %p73 = scmp.ne.s32.totalorder %s65, %s67
      %p74 = scmp.eq.s32.totalorder %s24, 1
      %p75 = por %p73, %p74
      %p76 = scmp.ne.s32.totalorder %s67, %s68
      %p77 = scmp.eq.s32.totalorder %s24, 0
      %p78 = por %p76, %p77
      %p79 = scmp.ne.s32.totalorder %s67, %s68
      %p80 = scmp.eq.s32.totalorder %s25, 1
      %p81 = por %p79, %p80
      %p83 = scmp.ne.s32.totalorder %s68, %s82
      %p84 = scmp.eq.s32.totalorder %s25, 0
      %p85 = por %p83, %p84
      %s87 = sadd.s32 %s86, 1
      %p90 = scmp.eq.s32.totalorder %s19, 1
      %p91 = scmp.ne.s32.totalorder %s86, %s88
      %p92 = scmp.eq.s32.totalorder %s19, 0
      %p93 = por %p91, %p92
      %p94 = scmp.ne.s32.totalorder %s86, %s88
      %p95 = scmp.eq.s32.totalorder %s24, 1
      %p96 = por %p94, %p95
      %p97 = scmp.ne.s32.totalorder %s88, %s89
      %p98 = scmp.eq.s32.totalorder %s24, 0
      %p99 = por %p97, %p98
      %p100 = scmp.ne.s32.totalorder %s88, %s89
      %p101 = scmp.eq.s32.totalorder %s25, 1
      %p102 = por %p100, %p101
      %p104 = scmp.ne.s32.totalorder %s89, %s103
      %p105 = scmp.eq.s32.totalorder %s25, 0
      %p106 = por %p104, %p105
      %s108 = sadd.s32 %s107, 1
      %p111 = scmp.eq.s32.totalorder %s19, 1
      %p112 = scmp.ne.s32.totalorder %s107, %s109
      %p113 = scmp.eq.s32.totalorder %s19, 0
      %p114 = por %p112, %p113
      %p115 = scmp.ne.s32.totalorder %s107, %s109
      %p116 = scmp.eq.s32.totalorder %s24, 1
      %p117 = por %p115, %p116
      %p118 = scmp.ne.s32.totalorder %s109, %s110
      %p119 = scmp.eq.s32.totalorder %s24, 0
      %p120 = por %p118, %p119
      %p121 = scmp.ne.s32.totalorder %s109, %s110
      %p122 = scmp.eq.s32.totalorder %s25, 1
      %p123 = por %p121, %p122
      %p125 = scmp.ne.s32.totalorder %s110, %s124
      %p126 = scmp.eq.s32.totalorder %s25, 0
      %p127 = por %p125, %p126
      %s129 = sadd.s32 %s128, 1
      %p132 = scmp.eq.s32.totalorder %s19, 1
      %p133 = scmp.ne.s32.totalorder %s128, %s130
      %p134 = scmp.eq.s32.totalorder %s19, 0
      %p135 = por %p133, %p134
      %p136 = scmp.ne.s32.totalorder %s128, %s130
      %p137 = scmp.eq.s32.totalorder %s24, 1
      %p138 = por %p136, %p137
      %p139 = scmp.ne.s32.totalorder %s130, %s131
      %p140 = scmp.eq.s32.totalorder %s24, 0
      %p141 = por %p139, %p140
      %p142 = scmp.ne.s32.totalorder %s130, %s131
      %p143 = scmp.eq.s32.totalorder %s25, 1
      %p144 = por %p142, %p143
      %p146 = scmp.ne.s32.totalorder %s131, %s145
      %p147 = scmp.eq.s32.totalorder %s25, 0
      %p148 = por %p146, %p147
      %s150 = sadd.s32 %s149, 1
      %p153 = scmp.eq.s32.totalorder %s19, 1
      %p154 = scmp.ne.s32.totalorder %s149, %s151
      %p155 = scmp.eq.s32.totalorder %s19, 0
      %p156 = por %p154, %p155
      %p157 = scmp.ne.s32.totalorder %s149, %s151
      %p158 = scmp.eq.s32.totalorder %s24, 1
      %p159 = por %p157, %p158
      %p160 = scmp.ne.s32.totalorder %s151, %s152
      %p161 = scmp.eq.s32.totalorder %s24, 0
      %p162 = por %p160, %p161
      %p163 = scmp.ne.s32.totalorder %s151, %s152
      %p164 = scmp.eq.s32.totalorder %s25, 1
      %p165 = por %p163, %p164
      %p167 = scmp.ne.s32.totalorder %s152, %s166
      %p168 = scmp.eq.s32.totalorder %s25, 0
      %p169 = por %p167, %p168
      %s170 = ssub.s32 %s26, %s38
      %p171 = scmp.eq.s32.totalorder %s170, 0
      %s173 = sadd.s32 %s172, 1
      %s174 = scalar_select %p171, %s172, %s173
      %p177 = pneg %p171
      %p178 = scmp.eq.s32.totalorder %s19, 1
      %p179 = por %p177, %p178
      %p180 = scmp.ne.s32.totalorder %s172, %s175
      %p181 = scmp.eq.s32.totalorder %s19, 0
      %p182 = por %p180, %p181
      %p183 = scmp.ne.s32.totalorder %s172, %s175
      %p184 = scmp.eq.s32.totalorder %s24, 1
      %p185 = por %p183, %p184
      %p186 = scmp.ne.s32.totalorder %s175, %s176
      %p187 = scmp.eq.s32.totalorder %s24, 0
      %p188 = por %p186, %p187
      %p189 = scmp.ne.s32.totalorder %s175, %s176
      %p190 = scmp.eq.s32.totalorder %s25, 1
      %p191 = por %p189, %p190
      %p193 = scmp.ne.s32.totalorder %s176, %s192
      %p194 = scmp.eq.s32.totalorder %s25, 0
      %p195 = por %p193, %p194
      %p196 = scmp.le.s32.totalorder 1, %s19
      %p197 = scmp.lt.s32.totalorder %s19, 3
      %p198 = pnand %p196, %p197
      %p199 = pneg %p198
      // Predicated region
      $region9: #{tpu_custom_call.1} parent=5 // pred_check
        _
      $region10: #{tpu_custom_call.1} parent=5 // pred_check_branch
        %201 = sbr.rel (%p198) target = $region12
      $region11: #{tpu_custom_call.1} parent=5 // pred_region
        %s202 = ssub.s32 %s19, 1
        // Predicated region
        $region13: #{tpu_custom_call.1} parent=11 // pred_check
          %p203 = pneg %p78
        $region14: #{tpu_custom_call.1} parent=11 // pred_check_branch
          %205 = sbr.rel (%p203) target = $region16
        $region15: #{tpu_custom_call.1} parent=11 // pred_region
          _
        $region16: #{tpu_custom_call.1} parent=11 // pred_fallthru
          _
        // Predicated region
        $region17: #{tpu_custom_call.1} parent=11 // pred_check
          %p206 = pneg %p99
        $region18: #{tpu_custom_call.1} parent=11 // pred_check_branch
          %208 = sbr.rel (%p206) target = $region20
        $region19: #{tpu_custom_call.1} parent=11 // pred_region
          _
        $region20: #{tpu_custom_call.1} parent=11 // pred_fallthru
          _
        // Predicated region
        $region21: #{tpu_custom_call.1} parent=11 // pred_check
          %p209 = pneg %p120
        $region22: #{tpu_custom_call.1} parent=11 // pred_check_branch
          %211 = sbr.rel (%p209) target = $region24
        $region23: #{tpu_custom_call.1} parent=11 // pred_region
          _
        $region24: #{tpu_custom_call.1} parent=11 // pred_fallthru
          _
        // Predicated region
        $region25: #{tpu_custom_call.1} parent=11 // pred_check
          %p212 = pneg %p141
        $region26: #{tpu_custom_call.1} parent=11 // pred_check_branch
          %214 = sbr.rel (%p212) target = $region28
        $region27: #{tpu_custom_call.1} parent=11 // pred_region
          _
        $region28: #{tpu_custom_call.1} parent=11 // pred_fallthru
          _
        // Predicated region
        $region29: #{tpu_custom_call.1} parent=11 // pred_check
          %p215 = pneg %p162
        $region30: #{tpu_custom_call.1} parent=11 // pred_check_branch
          %217 = sbr.rel (%p215) target = $region32
        $region31: #{tpu_custom_call.1} parent=11 // pred_region
          _
        $region32: #{tpu_custom_call.1} parent=11 // pred_fallthru
          _
      $region12: #{tpu_custom_call.1} parent=5 // pred_fallthru
        _
      %p218 = scmp.lt.s32.totalorder %s19, 2
      // Predicated region
      $region33: #{tpu_custom_call.1} parent=5 // pred_check
        %p219 = pneg %p218
      $region34: #{tpu_custom_call.1} parent=5 // pred_check_branch
        %221 = sbr.rel (%p219) target = $region36
      $region35: #{tpu_custom_call.1} parent=5 // pred_region
        // Predicated region
        $region37: #{tpu_custom_call.1} parent=35 // pred_check
          %p222 = pneg %p51
        $region38: #{tpu_custom_call.1} parent=35 // pred_check_branch
          %224 = sbr.rel (%p222) target = $region40
        $region39: #{tpu_custom_call.1} parent=35 // pred_region
          %s225 = sand.u32 %s41, 1
          %s226 = scalar_lea.sflag [#allocation7], %s225
          %s227 = sand.u32 %s41, 1
          %s228 = smul.addr %s227, 64
          %s229 = scalar_lea.vmem [#allocation6], %s228
          %s231 = ssub.s32 1024, 1024
          %232 = vsyncadd %s226, %s231
          %s233 = smul.addr %s26, 8
          %s234 = smul.addr %s233, 128
          %s235 = scalar_lea.hbm %s0, %s234
          %s236 = sshll.u32 %s229, 4
          %s237 = int_to_ptr.vmem [resolvable:$true] %s236
          %242 = dma.hbm_to_vmem [thread:$0]  %s235, 1024, %s237, %s226, 256, 256, 16
        $region40: #{tpu_custom_call.1} parent=35 // pred_fallthru
          _
      $region36: #{tpu_custom_call.1} parent=5 // pred_fallthru
        _
      %p243 = scmp.le.s32.totalorder 1, %s19
      %p244 = scmp.lt.s32.totalorder %s19, 3
      %p245 = pnand %p243, %p244
      %p246 = pneg %p245
      // Predicated region
      $region41: #{tpu_custom_call.1} parent=5 // pred_check
        _
      $region42: #{tpu_custom_call.1} parent=5 // pred_check_branch
        %248 = sbr.rel (%p245) target = $region44
      $region43: #{tpu_custom_call.1} parent=5 // pred_region
        %s249 = ssub.s32 %s19, 1
        %s250 = sand.u32 %s44, 1
        %s251 = scalar_lea.sflag [#allocation7], %s250
        %s252 = sand.u32 %s44, 1
        %s253 = smul.addr %s252, 64
        %s254 = scalar_lea.vmem [#allocation6], %s253
        // Predicated region
        $region45: #{tpu_custom_call.1} parent=43 // pred_check
          %p255 = pneg %p57
        $region46: #{tpu_custom_call.1} parent=43 // pred_check_branch
          %257 = sbr.rel (%p255) target = $region48
        $region47: #{tpu_custom_call.1} parent=43 // pred_region
          %258 = dma.done %s251, 1024
        $region48: #{tpu_custom_call.1} parent=43 // pred_fallthru
          _
        %s259 = sand.u32 %s44, 1
        %s260 = scalar_lea.sflag [#allocation7], %s259
        %s261 = sand.u32 %s44, 1
        %s262 = smul.addr %s261, 64
        %s263 = scalar_lea.vmem [#allocation6], %s262
        %p264 = pneg %p57
        %p265 = pneg %p54
        %p266 = pneg %p78
        %p267 = pneg %p75
        %p268 = pneg %p99
        %p269 = pneg %p96
        %p270 = pneg %p120
        %p271 = pneg %p117
        %p272 = pneg %p141
        %p273 = pneg %p138
        %p274 = pneg %p162
        %p275 = pneg %p159
        %p276 = pneg %p188
        %p277 = pneg %p185
        %s278 = sand.u32 %s175, 1
        %s279 = scalar_lea.sflag [#allocation8], %s278
        %s280 = sand.u32 %s175, 1
        %s281 = smul.addr %s280, 64
        %s282 = scalar_lea.vmem [#allocation9], %s281
        %p284 = scmp.eq.s32.totalorder %s29, 0
        // Predicated region
        $region49: #{tpu_custom_call.1} parent=43 // pred_check
          %p285 = pneg %p284
        $region50: #{tpu_custom_call.1} parent=43 // pred_check_branch
          %287 = sbr.rel (%p285) target = $region52
        $region51: #{tpu_custom_call.1} parent=43 // pred_region
          %v288 = vld [vmem:[%s254] sm:$0xff]
          %v289 = vld [vmem:[%s254 + $0x8] sm:$0xff]
          %v290 = vld [vmem:[%s254 + $0x10] sm:$0xff]
          %v291 = vld [vmem:[%s254 + $0x18] sm:$0xff]
          %v292 = vld [vmem:[%s254 + $0x20] sm:$0xff]
          %v293 = vld [vmem:[%s254 + $0x28] sm:$0xff]
          %v294 = vld [vmem:[%s254 + $0x30] sm:$0xff]
          %v295 = vld [vmem:[%s254 + $0x38] sm:$0xff]
          %v296 = vpack.c.bf16 %v290, %v288
          %v297 = vpack.c.bf16 %v291, %v289
          %v298 = vpack.c.bf16 %v294, %v292
          %v299 = vpack.c.bf16 %v295, %v293
          %v300 = vld [vmem:[%s1] sm:$0xf]
          %v301 = vld [vmem:[%s2] sm:$0xff]
          %303 = vset.pattern.permute.xlu0 0
          %304 = vperm.xlu0 %303, %v301
          %v305 = vpop.permute.xlu0 %304
          %vm307 = vcmask 261120
          %v309 = vsel %vm307, %v300, 0
          %311 = vmatprep.subr.bf16.mxu0 %v297
          %312 = vmatpush1.bf16.msra.mxu0 %v296
          %313 = vmatprep.subr.bf16.mxu0 %v299
          %314 = vmatpush1.bf16.msra.mxu0 %v298
          %315 = vmatprep.subr.bf16.mxu0 0
          %316 = vmatpush1.bf16.msra.mxu0 0
          %317 = vmatprep.subr.bf16.mxu0 0
          %318 = vmatpush1.bf16.msra.mxu0 0
          %319 = vmatprep.subr.bf16.mxu0 0
          %320 = vmatpush1.bf16.msra.mxu0 0
          %321 = vmatprep.subr.bf16.mxu0 0
          %322 = vmatpush1.bf16.msra.mxu0 0
          %323 = vmatprep.subr.bf16.mxu0 0
          %324 = vmatpush1.bf16.msra.mxu0 0
          %325 = vmatprep.subr.bf16.mxu0 0
          %326 = vmatpush1.bf16.msra.mxu0 0
          %327 = vmatprep.subr.bf16.mxu0 0
          %328 = vmatpush1.bf16.msra.mxu0 0
          %329 = vmatprep.subr.bf16.mxu0 0
          %330 = vmatpush1.bf16.msra.mxu0 0
          %331 = vmatprep.subr.bf16.mxu0 0
          %332 = vmatpush1.bf16.msra.mxu0 0
          %333 = vmatprep.subr.bf16.mxu0 0
          %334 = vmatpush1.bf16.msra.mxu0 0
          %335 = vmatprep.subr.bf16.mxu0 0
          %336 = vmatpush1.bf16.msra.mxu0 0
          %337 = vmatprep.subr.bf16.mxu0 0
          %338 = vmatpush1.bf16.msra.mxu0 0
          %339 = vmatprep.subr.bf16.mxu0 0
          %340 = vmatpush1.bf16.msra.mxu0 0
          %341 = vmatprep.subr.bf16.mxu0 0
          %342 = vmatpush1.bf16.msra.mxu0 0
          %343 = vmatprep.mubr.bf16.mxu0 0
          %344 = vmatmul.mubr.bf16.gmra.mrb[0].mxu0 %v309
          %v345 = vpop.f32.mrb[0].mxu0
          %v346 = vadd.f32 %v305, %v345
          %v347 = vpop.f32.mrb[0].mxu0
          %v348 = vadd.f32 %v305, %v347
          %v349 = vpop.f32.mrb[0].mxu0
          %v350 = vpop.f32.mrb[0].mxu0
          %351 = vdwg.mxu0
          %v352 = vpack.c.bf16 %v346, %v346
          %v353 = vpack.c.bf16 %v348, %v348
          %v356 = vunpack.c.l.b16 %v352
          %v357 = vunpack.c.l.b16 %v353
          %v358 = vpack.c.b16 %v357, %v356
          %360 = vst [vmem:[#allocation2] sm:$0xff] %v358
          %v361 = vlaneseq
          %vm362 = vcmp.ge.s32.totalorder %v361, 0
          %vm363 = vcmp.lt.s32.totalorder %v361, 256
          %vm364 = vmand %vm362, %vm363
          %365 = vst.msk [vmem:[#allocation3] sm:$0x3] %vm364, -inf
          %366 = vst.msk [vmem:[#allocation4] sm:$0x3] %vm364, 0.0
          %367 = vst [vmem:[%s282] sm:$0xff] 0.0
          %368 = vst [vmem:[%s282 + $0x8] sm:$0xff] 0.0
          %369 = vst [vmem:[%s282 + $0x10] sm:$0xff] 0.0
          %370 = vst [vmem:[%s282 + $0x18] sm:$0xff] 0.0
          %371 = vst [vmem:[%s282 + $0x20] sm:$0xff] 0.0
          %372 = vst [vmem:[%s282 + $0x28] sm:$0xff] 0.0
          %373 = vst [vmem:[%s282 + $0x30] sm:$0xff] 0.0
          %374 = vst [vmem:[%s282 + $0x38] sm:$0xff] 0.0
        $region52: #{tpu_custom_call.1} parent=43 // pred_fallthru
          _
        %s375 = smul.u32 %s29, 256
        %s376 = sshra.s32 %s375, 7
        %s377 = sand.u32 %s375, 127
        %s378 = smul.addr %s376, 8
        %s379 = scalar_lea.vmem %s254, %s378 [#allocation6]
        %v380 = vld [vmem:[%s379] sm:$0xff]
        %v381 = vld [vmem:[%s379 + $0x8] sm:$0xff]
        %v382 = vld [vmem:[%s379 + $0x10] sm:$0xff]
        %v383 = vld [vmem:[%s379 + $0x18] sm:$0xff]
        %v384 = vld [vmem:[%s379 + $0x20] sm:$0xff]
        %v385 = vld [vmem:[%s379 + $0x28] sm:$0xff]
        %v386 = vld [vmem:[%s379 + $0x30] sm:$0xff]
        %v387 = vld [vmem:[%s379 + $0x38] sm:$0xff]
        %v388 = vpack.c.bf16 %v382, %v380
        %v389 = vpack.c.bf16 %v383, %v381
        %v390 = vpack.c.bf16 %v386, %v384
        %v391 = vpack.c.bf16 %v387, %v385
        %v392 = vld [vmem:[%s3] sm:$0xf]
        %v393 = vld [vmem:[%s3 + $0x4] sm:$0xf]
        %v394 = vld [vmem:[%s3 + $0x8] sm:$0xf]
        %v395 = vld [vmem:[%s3 + $0xc] sm:$0xf]
        %v396 = vld [vmem:[%s3 + $0x10] sm:$0xf]
        %v397 = vld [vmem:[%s4] sm:$0xff]
        %v398 = vld [vmem:[%s4 + $0x8] sm:$0xff]
        %v399 = vld [vmem:[%s4 + $0x10] sm:$0xff]
        %v400 = vld [vmem:[%s4 + $0x18] sm:$0xff]
        %v401 = vld [vmem:[%s4 + $0x20] sm:$0xff]
        %403 = vset.pattern.permute.xlu0 0
        %404 = vperm.xlu0 %403, %v397
        %v405 = vpop.permute.xlu0 %404
        %408 = vset.pattern.permute.xlu0 0
        %409 = vperm.xlu0 %408, %v398
        %v410 = vpop.permute.xlu0 %409
        %413 = vset.pattern.permute.xlu0 0
        %414 = vperm.xlu0 %413, %v399
        %v415 = vpop.permute.xlu0 %414
        %418 = vset.pattern.permute.xlu0 0
        %419 = vperm.xlu0 %418, %v400
        %v420 = vpop.permute.xlu0 %419
        %423 = vset.pattern.permute.xlu0 0
        %424 = vperm.xlu0 %423, %v401
        %v425 = vpop.permute.xlu0 %424
        %v432 = vunpack.c.l.b16 %v392
        %v433 = vunpack.c.l.b16 %v393
        %v434 = vunpack.c.l.b16 %v394
        %v435 = vunpack.c.l.b16 %v395
        %v436 = vunpack.c.l.b16 %v396
        %v437 = vpack.c.b16 %v433, %v432
        %v438 = vpack.c.b16 %v435, %v434
        %v439 = vpack.c.b16 %v436, %v436
        %vm440 = vcmask 261120
        %v442 = vsel %vm440, %v437, 0
        %v445 = vsel %vm440, %v438, 0
        %v448 = vsel %vm440, %v439, 0
        %450 = vmatprep.subr.bf16.mxu0 %v389
        %451 = vmatpush1.bf16.msra.mxu0 %v388
        %452 = vmatprep.subr.bf16.mxu0 %v391
        %453 = vmatpush1.bf16.msra.mxu0 %v390
        %454 = vmatprep.subr.bf16.mxu0 0
        %455 = vmatpush1.bf16.msra.mxu0 0
        %456 = vmatprep.subr.bf16.mxu0 0
        %457 = vmatpush1.bf16.msra.mxu0 0
        %458 = vmatprep.subr.bf16.mxu0 0
        %459 = vmatpush1.bf16.msra.mxu0 0
        %460 = vmatprep.subr.bf16.mxu0 0
        %461 = vmatpush1.bf16.msra.mxu0 0
        %462 = vmatprep.subr.bf16.mxu0 0
        %463 = vmatpush1.bf16.msra.mxu0 0
        %464 = vmatprep.subr.bf16.mxu0 0
        %465 = vmatpush1.bf16.msra.mxu0 0
        %466 = vmatprep.subr.bf16.mxu0 0
        %467 = vmatpush1.bf16.msra.mxu0 0
        %468 = vmatprep.subr.bf16.mxu0 0
        %469 = vmatpush1.bf16.msra.mxu0 0
        %470 = vmatprep.subr.bf16.mxu0 0
        %471 = vmatpush1.bf16.msra.mxu0 0
        %472 = vmatprep.subr.bf16.mxu0 0
        %473 = vmatpush1.bf16.msra.mxu0 0
        %474 = vmatprep.subr.bf16.mxu0 0
        %475 = vmatpush1.bf16.msra.mxu0 0
        %476 = vmatprep.subr.bf16.mxu0 0
        %477 = vmatpush1.bf16.msra.mxu0 0
        %478 = vmatprep.subr.bf16.mxu0 0
        %479 = vmatpush1.bf16.msra.mxu0 0
        %480 = vmatprep.subr.bf16.mxu0 0
        %481 = vmatpush1.bf16.msra.mxu0 0
        %482 = vmatprep.mubr.bf16.mxu0 0
        %483 = vmatmul.mubr.bf16.gmra.mrb[0].mxu0 %v442
        %v484 = vpop.f32.mrb[0].mxu0
        %v485 = vadd.f32 %v405, %v484
        %v486 = vpop.f32.mrb[0].mxu0
        %v487 = vadd.f32 %v405, %v486
        %v488 = vpop.f32.mrb[0].mxu0
        %v489 = vadd.f32 %v410, %v488
        %v490 = vpop.f32.mrb[0].mxu0
        %v491 = vadd.f32 %v410, %v490
        %492 = vmatprep.mubr.bf16.mxu0 0
        %493 = vmatmul.mubr.bf16.gmra.mrb[0].mxu0 %v445
        %v494 = vpop.f32.mrb[0].mxu0
        %v495 = vadd.f32 %v415, %v494
        %v496 = vpop.f32.mrb[0].mxu0
        %v497 = vadd.f32 %v415, %v496
        %v498 = vpop.f32.mrb[0].mxu0
        %v499 = vadd.f32 %v420, %v498
        %v500 = vpop.f32.mrb[0].mxu0
        %v501 = vadd.f32 %v420, %v500
        %502 = vmatprep.mubr.bf16.mxu0 0
        %503 = vmatmul.mubr.bf16.gmra.mrb[0].mxu0 %v448
        %v504 = vpop.f32.mrb[0].mxu0
        %v505 = vadd.f32 %v425, %v504
        %v506 = vpop.f32.mrb[0].mxu0
        %v507 = vadd.f32 %v425, %v506
        %v508 = vpop.f32.mrb[0].mxu0
        %v509 = vpop.f32.mrb[0].mxu0
        %510 = vdwg.mxu0
        %v511 = vpack.c.bf16 %v485, %v485
        %v512 = vpack.c.bf16 %v487, %v487
        %v513 = vld [vmem:[#allocation2] sm:$0xff]
        %514 = vxpose.xlu0.c.b16.start [1/8] %v511, 128
        %515 = vxpose.xlu0.c.b16.cont [2/8] 0, 128
        %516 = vxpose.xlu0.c.b16.cont [3/8] 0, 128
        %517 = vxpose.xlu0.c.b16.cont [4/8] 0, 128
        %518 = vxpose.xlu0.c.b16.cont [5/8] 0, 128
        %519 = vxpose.xlu0.c.b16.cont [6/8] 0, 128
        %520 = vxpose.xlu0.c.b16.cont [7/8] 0, 128
        %521 = vxpose.xlu0.c.b16.end [8/8] 0, 128
        %v522 = vpop.trf.xlu0
        %v523 = vpop.trf.xlu0
        %v524 = vpop.trf.xlu0
        %v525 = vpop.trf.xlu0
        %v526 = vpop.trf.xlu0
        %v527 = vpop.trf.xlu0
        %v528 = vpop.trf.xlu0
        %v529 = vpop.trf.xlu0
        %530 = vxpose.xlu0.c.b16.start [1/8] %v512, 128
        %531 = vxpose.xlu0.c.b16.cont [2/8] 0, 128
        %532 = vxpose.xlu0.c.b16.cont [3/8] 0, 128
        %533 = vxpose.xlu0.c.b16.cont [4/8] 0, 128
        %534 = vxpose.xlu0.c.b16.cont [5/8] 0, 128
        %535 = vxpose.xlu0.c.b16.cont [6/8] 0, 128
        %536 = vxpose.xlu0.c.b16.cont [7/8] 0, 128
        %537 = vxpose.xlu0.c.b16.end [8/8] 0, 128
        %v538 = vpop.trf.xlu0
        %v539 = vpop.trf.xlu0
        %v540 = vpop.trf.xlu0
        %v541 = vpop.trf.xlu0
        %v542 = vpop.trf.xlu0
        %v543 = vpop.trf.xlu0
        %v544 = vpop.trf.xlu0
        %v545 = vpop.trf.xlu0
        %v547 = vunpack.c.l.b16 %v513
        %v548 = vunpack.c.h.b16 %v513
        %v549 = vpack.c.b16 %v547, %v547
        %v550 = vpack.c.b16 %v548, %v548
        %vm551 = vcmask 64512
        %v553 = vsel %vm551, %v522, 0
        %v556 = vsel %vm551, %v523, 0
        %v559 = vsel %vm551, %v524, 0
        %v562 = vsel %vm551, %v525, 0
        %v565 = vsel %vm551, %v526, 0
        %v568 = vsel %vm551, %v527, 0
        %v571 = vsel %vm551, %v528, 0
        %v574 = vsel %vm551, %v529, 0
        %v577 = vsel %vm551, %v538, 0
        %v580 = vsel %vm551, %v539, 0
        %v583 = vsel %vm551, %v540, 0
        %v586 = vsel %vm551, %v541, 0
        %v589 = vsel %vm551, %v542, 0
        %v592 = vsel %vm551, %v543, 0
        %v595 = vsel %vm551, %v544, 0
        %v598 = vsel %vm551, %v545, 0
        %vm600 = vcmask 1043456
        %v602 = vsel %vm600, %v549, 0
        %v605 = vsel %vm600, %v550, 0
        %607 = vmatprep.subr.bf16.mxu0 %v605
        %608 = vmatpush1.bf16.msra.mxu0 %v602
        %609 = vmatprep.subr.bf16.mxu0 0
        %610 = vmatpush1.bf16.msra.mxu0 0
        %611 = vmatprep.subr.bf16.mxu0 0
        %612 = vmatpush1.bf16.msra.mxu0 0
        %613 = vmatprep.subr.bf16.mxu0 0
        %614 = vmatpush1.bf16.msra.mxu0 0
        %615 = vmatprep.subr.bf16.mxu0 0
        %616 = vmatpush1.bf16.msra.mxu0 0
        %617 = vmatprep.subr.bf16.mxu0 0
        %618 = vmatpush1.bf16.msra.mxu0 0
        %619 = vmatprep.subr.bf16.mxu0 0
        %620 = vmatpush1.bf16.msra.mxu0 0
        %621 = vmatprep.subr.bf16.mxu0 0
        %622 = vmatpush1.bf16.msra.mxu0 0
        %623 = vmatprep.subr.bf16.mxu0 0
        %624 = vmatpush1.bf16.msra.mxu0 0
        %625 = vmatprep.subr.bf16.mxu0 0
        %626 = vmatpush1.bf16.msra.mxu0 0
        %627 = vmatprep.subr.bf16.mxu0 0
        %628 = vmatpush1.bf16.msra.mxu0 0
        %629 = vmatprep.subr.bf16.mxu0 0
        %630 = vmatpush1.bf16.msra.mxu0 0
        %631 = vmatprep.subr.bf16.mxu0 0
        %632 = vmatpush1.bf16.msra.mxu0 0
        %633 = vmatprep.subr.bf16.mxu0 0
        %634 = vmatpush1.bf16.msra.mxu0 0
        %635 = vmatprep.subr.bf16.mxu0 0
        %636 = vmatpush1.bf16.msra.mxu0 0
        %637 = vmatprep.subr.bf16.mxu0 0
        %638 = vmatpush1.bf16.msra.mxu0 0
        %639 = vmatprep.mubr.bf16.mxu0 0
        %640 = vmatmul.mubr.bf16.gmra.mrb[0].mxu0 %v553
        %v641 = vpop.f32.mrb[0].mxu0
        %v642 = vadd.f32 0.0, %v641
        %v643 = vpop.f32.mrb[0].mxu0
        %v644 = vadd.f32 0.0, %v643
        %v645 = vpop.f32.mrb[0].mxu0
        %v646 = vadd.f32 0.0, %v645
        %v647 = vpop.f32.mrb[0].mxu0
        %v648 = vadd.f32 0.0, %v647
        %649 = vmatprep.mubr.bf16.mxu0 0
        %650 = vmatmul.mubr.bf16.gmra.mrb[0].mxu0 %v556
        %v651 = vpop.f32.mrb[0].mxu0
        %v652 = vadd.f32 0.0, %v651
        %v653 = vpop.f32.mrb[0].mxu0
        %v654 = vadd.f32 0.0, %v653
        %v655 = vpop.f32.mrb[0].mxu0
        %v656 = vadd.f32 0.0, %v655
        %v657 = vpop.f32.mrb[0].mxu0
        %v658 = vadd.f32 0.0, %v657
        %659 = vmatprep.mubr.bf16.mxu0 0
        %660 = vmatmul.mubr.bf16.gmra.mrb[0].mxu0 %v559
        %v661 = vpop.f32.mrb[0].mxu0
        %v662 = vadd.f32 0.0, %v661
        %v663 = vpop.f32.mrb[0].mxu0
        %v664 = vadd.f32 0.0, %v663
        %v665 = vpop.f32.mrb[0].mxu0
        %v666 = vadd.f32 0.0, %v665
        %v667 = vpop.f32.mrb[0].mxu0
        %v668 = vadd.f32 0.0, %v667
        %669 = vmatprep.mubr.bf16.mxu0 0
        %670 = vmatmul.mubr.bf16.gmra.mrb[0].mxu0 %v562
        %v671 = vpop.f32.mrb[0].mxu0
        %v672 = vadd.f32 0.0, %v671
        %v673 = vpop.f32.mrb[0].mxu0
        %v674 = vadd.f32 0.0, %v673
        %v675 = vpop.f32.mrb[0].mxu0
        %v676 = vadd.f32 0.0, %v675
        %v677 = vpop.f32.mrb[0].mxu0
        %v678 = vadd.f32 0.0, %v677
        %679 = vmatprep.mubr.bf16.mxu0 0
        %680 = vmatmul.mubr.bf16.gmra.mrb[0].mxu0 %v565
        %v681 = vpop.f32.mrb[0].mxu0
        %v682 = vadd.f32 0.0, %v681
        %v683 = vpop.f32.mrb[0].mxu0
        %v684 = vadd.f32 0.0, %v683
        %v685 = vpop.f32.mrb[0].mxu0
        %v686 = vadd.f32 0.0, %v685
        %v687 = vpop.f32.mrb[0].mxu0
        %v688 = vadd.f32 0.0, %v687
        %689 = vmatprep.mubr.bf16.mxu0 0
        %690 = vmatmul.mubr.bf16.gmra.mrb[0].mxu0 %v568
        %v691 = vpop.f32.mrb[0].mxu0
        %v692 = vadd.f32 0.0, %v691
        %v693 = vpop.f32.mrb[0].mxu0
        %v694 = vadd.f32 0.0, %v693
        %v695 = vpop.f32.mrb[0].mxu0
        %v696 = vadd.f32 0.0, %v695
        %v697 = vpop.f32.mrb[0].mxu0
        %v698 = vadd.f32 0.0, %v697
        %699 = vmatprep.mubr.bf16.mxu0 0
        %700 = vmatmul.mubr.bf16.gmra.mrb[0].mxu0 %v571
        %v701 = vpop.f32.mrb[0].mxu0
        %v702 = vadd.f32 0.0, %v701
        %v703 = vpop.f32.mrb[0].mxu0
        %v704 = vadd.f32 0.0, %v703
        %v705 = vpop.f32.mrb[0].mxu0
        %v706 = vadd.f32 0.0, %v705
        %v707 = vpop.f32.mrb[0].mxu0
        %v708 = vadd.f32 0.0, %v707
        %709 = vmatprep.mubr.bf16.mxu0 0
        %710 = vmatmul.mubr.bf16.gmra.mrb[0].mxu0 %v574
        %v711 = vpop.f32.mrb[0].mxu0
        %v712 = vadd.f32 0.0, %v711
        %v713 = vpop.f32.mrb[0].mxu0
        %v714 = vadd.f32 0.0, %v713
        %v715 = vpop.f32.mrb[0].mxu0
        %v716 = vadd.f32 0.0, %v715
        %v717 = vpop.f32.mrb[0].mxu0
        %v718 = vadd.f32 0.0, %v717
        %719 = vmatprep.mubr.bf16.mxu0 0
        %720 = vmatmul.mubr.bf16.gmra.mrb[0].mxu0 %v577
        %v721 = vpop.f32.mrb[0].mxu0
        %v722 = vadd.f32 0.0, %v721
        %v723 = vpop.f32.mrb[0].mxu0
        %v724 = vadd.f32 0.0, %v723
        %v725 = vpop.f32.mrb[0].mxu0
        %v726 = vadd.f32 0.0, %v725
        %v727 = vpop.f32.mrb[0].mxu0
        %v728 = vadd.f32 0.0, %v727
        %729 = vmatprep.mubr.bf16.mxu0 0
        %730 = vmatmul.mubr.bf16.gmra.mrb[0].mxu0 %v580
        %v731 = vpop.f32.mrb[0].mxu0
        %v732 = vadd.f32 0.0, %v731
        %v733 = vpop.f32.mrb[0].mxu0
        %v734 = vadd.f32 0.0, %v733
        %v735 = vpop.f32.mrb[0].mxu0
        %v736 = vadd.f32 0.0, %v735
        %v737 = vpop.f32.mrb[0].mxu0
        %v738 = vadd.f32 0.0, %v737
        %739 = vmatprep.mubr.bf16.mxu0 0
        %740 = vmatmul.mubr.bf16.gmra.mrb[0].mxu0 %v583
        %v741 = vpop.f32.mrb[0].mxu0
        %v742 = vadd.f32 0.0, %v741
        %v743 = vpop.f32.mrb[0].mxu0
        %v744 = vadd.f32 0.0, %v743
        %v745 = vpop.f32.mrb[0].mxu0
        %v746 = vadd.f32 0.0, %v745
        %v747 = vpop.f32.mrb[0].mxu0
        %v748 = vadd.f32 0.0, %v747
        %749 = vmatprep.mubr.bf16.mxu0 0
        %750 = vmatmul.mubr.bf16.gmra.mrb[0].mxu0 %v586
        %v751 = vpop.f32.mrb[0].mxu0
        %v752 = vadd.f32 0.0, %v751
        %v753 = vpop.f32.mrb[0].mxu0
        %v754 = vadd.f32 0.0, %v753
        %v755 = vpop.f32.mrb[0].mxu0
        %v756 = vadd.f32 0.0, %v755
        %v757 = vpop.f32.mrb[0].mxu0
        %v758 = vadd.f32 0.0, %v757
        %759 = vmatprep.mubr.bf16.mxu0 0
        %760 = vmatmul.mubr.bf16.gmra.mrb[0].mxu0 %v589
        %v761 = vpop.f32.mrb[0].mxu0
        %v762 = vadd.f32 0.0, %v761
        %v763 = vpop.f32.mrb[0].mxu0
        %v764 = vadd.f32 0.0, %v763
        %v765 = vpop.f32.mrb[0].mxu0
        %v766 = vadd.f32 0.0, %v765
        %v767 = vpop.f32.mrb[0].mxu0
        %v768 = vadd.f32 0.0, %v767
        %769 = vmatprep.mubr.bf16.mxu0 0
        %770 = vmatmul.mubr.bf16.gmra.mrb[0].mxu0 %v592
        %v771 = vpop.f32.mrb[0].mxu0
        %v772 = vadd.f32 0.0, %v771
        %v773 = vpop.f32.mrb[0].mxu0
        %v774 = vadd.f32 0.0, %v773
        %v775 = vpop.f32.mrb[0].mxu0
        %v776 = vadd.f32 0.0, %v775
        %v777 = vpop.f32.mrb[0].mxu0
        %v778 = vadd.f32 0.0, %v777
        %779 = vmatprep.mubr.bf16.mxu0 0
        %780 = vmatmul.mubr.bf16.gmra.mrb[0].mxu0 %v595
        %v781 = vpop.f32.mrb[0].mxu0
        %v782 = vadd.f32 0.0, %v781
        %v783 = vpop.f32.mrb[0].mxu0
        %v784 = vadd.f32 0.0, %v783
        %v785 = vpop.f32.mrb[0].mxu0
        %v786 = vadd.f32 0.0, %v785
        %v787 = vpop.f32.mrb[0].mxu0
        %v788 = vadd.f32 0.0, %v787
        %789 = vmatprep.mubr.bf16.mxu0 0
        %790 = vmatmul.mubr.bf16.gmra.mrb[0].mxu0 %v598
        %v791 = vpop.f32.mrb[0].mxu0
        %v792 = vadd.f32 0.0, %v791
        %v793 = vpop.f32.mrb[0].mxu0
        %v794 = vadd.f32 0.0, %v793
        %v795 = vpop.f32.mrb[0].mxu0
        %v796 = vadd.f32 0.0, %v795
        %v797 = vpop.f32.mrb[0].mxu0
        %v798 = vadd.f32 0.0, %v797
        %799 = vdwg.mxu0
        %v800 = vld [vmem:[#allocation3] sm:$0x3]
        %v801 = vmax.f32 %v642, %v652
        %v802 = vmax.f32 %v646, %v656
        %v803 = vmax.f32 %v801, %v662
        %v804 = vmax.f32 %v802, %v666
        %v805 = vmax.f32 %v803, %v672
        %v806 = vmax.f32 %v804, %v676
        %v807 = vmax.f32 %v805, %v682
        %v808 = vmax.f32 %v806, %v686
        %v809 = vmax.f32 %v807, %v692
        %v810 = vmax.f32 %v808, %v696
        %v811 = vmax.f32 %v809, %v702
        %v812 = vmax.f32 %v810, %v706
        %v813 = vmax.f32 %v811, %v712
        %v814 = vmax.f32 %v812, %v716
        %v815 = vmax.f32 %v813, %v722
        %v816 = vmax.f32 %v814, %v726
        %v817 = vmax.f32 %v815, %v732
        %v818 = vmax.f32 %v816, %v736
        %v819 = vmax.f32 %v817, %v742
        %v820 = vmax.f32 %v818, %v746
        %v821 = vmax.f32 %v819, %v752
        %v822 = vmax.f32 %v820, %v756
        %v823 = vmax.f32 %v821, %v762
        %v824 = vmax.f32 %v822, %v766
        %v825 = vmax.f32 %v823, %v772
        %v826 = vmax.f32 %v824, %v776
        %v827 = vmax.f32 %v825, %v782
        %v828 = vmax.f32 %v826, %v786
        %v829 = vmax.f32 %v827, %v792
        %v830 = vmax.f32 %v828, %v796
        %v831 = vmax.f32 %v829, %v830
        %v832 = vrot.slane %v831, 4
        %v833 = vmax.f32 %v831, %v832
        %v834 = vrot.slane %v833, 2
        %v835 = vmax.f32 %v833, %v834
        %v836 = vrot.slane %v835, 1
        %v837 = vmax.f32 %v835, %v836
        %v838 = vmax.f32 %v644, %v654
        %v839 = vmax.f32 %v648, %v658
        %v840 = vmax.f32 %v838, %v664
        %v841 = vmax.f32 %v839, %v668
        %v842 = vmax.f32 %v840, %v674
        %v843 = vmax.f32 %v841, %v678
        %v844 = vmax.f32 %v842, %v684
        %v845 = vmax.f32 %v843, %v688
        %v846 = vmax.f32 %v844, %v694
        %v847 = vmax.f32 %v845, %v698
        %v848 = vmax.f32 %v846, %v704
        %v849 = vmax.f32 %v847, %v708
        %v850 = vmax.f32 %v848, %v714
        %v851 = vmax.f32 %v849, %v718
        %v852 = vmax.f32 %v850, %v724
        %v853 = vmax.f32 %v851, %v728
        %v854 = vmax.f32 %v852, %v734
        %v855 = vmax.f32 %v853, %v738
        %v856 = vmax.f32 %v854, %v744
        %v857 = vmax.f32 %v855, %v748
        %v858 = vmax.f32 %v856, %v754
        %v859 = vmax.f32 %v857, %v758
        %v860 = vmax.f32 %v858, %v764
        %v861 = vmax.f32 %v859, %v768
        %v862 = vmax.f32 %v860, %v774
        %v863 = vmax.f32 %v861, %v778
        %v864 = vmax.f32 %v862, %v784
        %v865 = vmax.f32 %v863, %v788
        %v866 = vmax.f32 %v864, %v794
        %v867 = vmax.f32 %v865, %v798
        %v868 = vmax.f32 %v866, %v867
        %v869 = vrot.slane %v868, 4
        %v870 = vmax.f32 %v868, %v869
        %v871 = vrot.slane %v870, 2
        %v872 = vmax.f32 %v870, %v871
        %v873 = vrot.slane %v872, 1
        %v874 = vmax.f32 %v872, %v873
        %v877 = vcombine.low %v837, %v874
        %v879 = vunpack.c.l.s4 1966171168
        %v880 = vunpack.c.0.s8 %v879
        %v881 = vlaneseq
        %v882 = vshrl.u32 %v881, 7
        %v883 = vsub.s32 %v880, %v882
        %v884 = vrot.slane %v877, %v883
        %v886 = vunpack.c.l.s4 1966171168
        %v887 = vunpack.c.0.s8 %v886
        %v888 = vlaneseq
        %v889 = vshrl.u32 %v888, 7
        %v890 = vsub.s32 %v887, %v889
        %v891 = vrot.slane %v884, %v890
        %v893 = vmax.f32 %v800, %v891
        %v894 = vsub.f32 %v800, %v893
        %v895 = vmul.f32 %v894, 1.442695
        %v896 = vpow.pop %v895
        %v898 = vlaneseq
        %v899 = vshrl.u32 %v898, 7
        %v900 = vsub.s32 0, %v899
        %v901 = vrot.slane %v893, %v900
        %v902 = vlaneseq
        %v903 = vshrl.u32 %v902, 7
        %v904 = vsub.s32 1, %v903
        %v905 = vrot.slane %v893, %v904
        %v908 = vsub.f32 %v642, %v901
        %v909 = vsub.f32 %v644, %v905
        %v910 = vsub.f32 %v646, %v901
        %v911 = vsub.f32 %v648, %v905
        %v912 = vsub.f32 %v652, %v901
        %v913 = vsub.f32 %v654, %v905
        %v914 = vsub.f32 %v656, %v901
        %v915 = vsub.f32 %v658, %v905
        %v916 = vsub.f32 %v662, %v901
        %v917 = vsub.f32 %v664, %v905
        %v918 = vsub.f32 %v666, %v901
        %v919 = vsub.f32 %v668, %v905
        %v920 = vsub.f32 %v672, %v901
        %v921 = vsub.f32 %v674, %v905
        %v922 = vsub.f32 %v676, %v901
        %v923 = vsub.f32 %v678, %v905
        %v924 = vsub.f32 %v682, %v901
        %v925 = vsub.f32 %v684, %v905
        %v926 = vsub.f32 %v686, %v901
        %v927 = vsub.f32 %v688, %v905
        %v928 = vsub.f32 %v692, %v901
        %v929 = vsub.f32 %v694, %v905
        %v930 = vsub.f32 %v696, %v901
        %v931 = vsub.f32 %v698, %v905
        %v932 = vsub.f32 %v702, %v901
        %v933 = vsub.f32 %v704, %v905
        %v934 = vsub.f32 %v706, %v901
        %v935 = vsub.f32 %v708, %v905
        %v936 = vsub.f32 %v712, %v901
        %v937 = vsub.f32 %v714, %v905
        %v938 = vsub.f32 %v716, %v901
        %v939 = vsub.f32 %v718, %v905
        %v940 = vsub.f32 %v722, %v901
        %v941 = vsub.f32 %v724, %v905
        %v942 = vsub.f32 %v726, %v901
        %v943 = vsub.f32 %v728, %v905
        %v944 = vsub.f32 %v732, %v901
        %v945 = vsub.f32 %v734, %v905
        %v946 = vsub.f32 %v736, %v901
        %v947 = vsub.f32 %v738, %v905
        %v948 = vsub.f32 %v742, %v901
        %v949 = vsub.f32 %v744, %v905
        %v950 = vsub.f32 %v746, %v901
        %v951 = vsub.f32 %v748, %v905
        %v952 = vsub.f32 %v752, %v901
        %v953 = vsub.f32 %v754, %v905
        %v954 = vsub.f32 %v756, %v901
        %v955 = vsub.f32 %v758, %v905
        %v956 = vsub.f32 %v762, %v901
        %v957 = vsub.f32 %v764, %v905
        %v958 = vsub.f32 %v766, %v901
        %v959 = vsub.f32 %v768, %v905
        %v960 = vsub.f32 %v772, %v901
        %v961 = vsub.f32 %v774, %v905
        %v962 = vsub.f32 %v776, %v901
        %v963 = vsub.f32 %v778, %v905
        %v964 = vsub.f32 %v782, %v901
        %v965 = vsub.f32 %v784, %v905
        %v966 = vsub.f32 %v786, %v901
        %v967 = vsub.f32 %v788, %v905
        %v968 = vsub.f32 %v792, %v901
        %v969 = vsub.f32 %v794, %v905
        %v970 = vsub.f32 %v796, %v901
        %v971 = vsub.f32 %v798, %v905
        %v972 = vmul.f32 %v908, 1.442695
        %v973 = vpow.pop %v972
        %v974 = vmul.f32 %v909, 1.442695
        %v975 = vpow.pop %v974
        %v976 = vmul.f32 %v910, 1.442695
        %v977 = vpow.pop %v976
        %v978 = vmul.f32 %v911, 1.442695
        %v979 = vpow.pop %v978
        %v980 = vmul.f32 %v912, 1.442695
        %v981 = vpow.pop %v980
        %v982 = vmul.f32 %v913, 1.442695
        %v983 = vpow.pop %v982
        %v984 = vmul.f32 %v914, 1.442695
        %v985 = vpow.pop %v984
        %v986 = vmul.f32 %v915, 1.442695
        %v987 = vpow.pop %v986
        %v988 = vmul.f32 %v916, 1.442695
        %v989 = vpow.pop %v988
        %v990 = vmul.f32 %v917, 1.442695
        %v991 = vpow.pop %v990
        %v992 = vmul.f32 %v918, 1.442695
        %v993 = vpow.pop %v992
        %v994 = vmul.f32 %v919, 1.442695
        %v995 = vpow.pop %v994
        %v996 = vmul.f32 %v920, 1.442695
        %v997 = vpow.pop %v996
        %v998 = vmul.f32 %v921, 1.442695
        %v999 = vpow.pop %v998
        %v1000 = vmul.f32 %v922, 1.442695
        %v1001 = vpow.pop %v1000
        %v1002 = vmul.f32 %v923, 1.442695
        %v1003 = vpow.pop %v1002
        %v1004 = vmul.f32 %v924, 1.442695
        %v1005 = vpow.pop %v1004
        %v1006 = vmul.f32 %v925, 1.442695
        %v1007 = vpow.pop %v1006
        %v1008 = vmul.f32 %v926, 1.442695
        %v1009 = vpow.pop %v1008
        %v1010 = vmul.f32 %v927, 1.442695
        %v1011 = vpow.pop %v1010
        %v1012 = vmul.f32 %v928, 1.442695
        %v1013 = vpow.pop %v1012
        %v1014 = vmul.f32 %v929, 1.442695
        %v1015 = vpow.pop %v1014
        %v1016 = vmul.f32 %v930, 1.442695
        %v1017 = vpow.pop %v1016
        %v1018 = vmul.f32 %v931, 1.442695
        %v1019 = vpow.pop %v1018
        %v1020 = vmul.f32 %v932, 1.442695
        %v1021 = vpow.pop %v1020
        %v1022 = vmul.f32 %v933, 1.442695
        %v1023 = vpow.pop %v1022
        %v1024 = vmul.f32 %v934, 1.442695
        %v1025 = vpow.pop %v1024
        %v1026 = vmul.f32 %v935, 1.442695
        %v1027 = vpow.pop %v1026
        %v1028 = vmul.f32 %v936, 1.442695
        %v1029 = vpow.pop %v1028
        %v1030 = vmul.f32 %v937, 1.442695
        %v1031 = vpow.pop %v1030
        %v1032 = vmul.f32 %v938, 1.442695
        %v1033 = vpow.pop %v1032
        %v1034 = vmul.f32 %v939, 1.442695
        %v1035 = vpow.pop %v1034
        %v1036 = vmul.f32 %v940, 1.442695
        %v1037 = vpow.pop %v1036
        %v1038 = vmul.f32 %v941, 1.442695
        %v1039 = vpow.pop %v1038
        %v1040 = vmul.f32 %v942, 1.442695
        %v1041 = vpow.pop %v1040
        %v1042 = vmul.f32 %v943, 1.442695
        %v1043 = vpow.pop %v1042
        %v1044 = vmul.f32 %v944, 1.442695
        %v1045 = vpow.pop %v1044
        %v1046 = vmul.f32 %v945, 1.442695
        %v1047 = vpow.pop %v1046
        %v1048 = vmul.f32 %v946, 1.442695
        %v1049 = vpow.pop %v1048
        %v1050 = vmul.f32 %v947, 1.442695
        %v1051 = vpow.pop %v1050
        %v1052 = vmul.f32 %v948, 1.442695
        %v1053 = vpow.pop %v1052
        %v1054 = vmul.f32 %v949, 1.442695
        %v1055 = vpow.pop %v1054
        %v1056 = vmul.f32 %v950, 1.442695
        %v1057 = vpow.pop %v1056
        %v1058 = vmul.f32 %v951, 1.442695
        %v1059 = vpow.pop %v1058
        %v1060 = vmul.f32 %v952, 1.442695
        %v1061 = vpow.pop %v1060
        %v1062 = vmul.f32 %v953, 1.442695
        %v1063 = vpow.pop %v1062
        %v1064 = vmul.f32 %v954, 1.442695
        %v1065 = vpow.pop %v1064
        %v1066 = vmul.f32 %v955, 1.442695
        %v1067 = vpow.pop %v1066
        %v1068 = vmul.f32 %v956, 1.442695
        %v1069 = vpow.pop %v1068
        %v1070 = vmul.f32 %v957, 1.442695
        %v1071 = vpow.pop %v1070
        %v1072 = vmul.f32 %v958, 1.442695
        %v1073 = vpow.pop %v1072
        %v1074 = vmul.f32 %v959, 1.442695
        %v1075 = vpow.pop %v1074
        %v1076 = vmul.f32 %v960, 1.442695
        %v1077 = vpow.pop %v1076
        %v1078 = vmul.f32 %v961, 1.442695
        %v1079 = vpow.pop %v1078
        %v1080 = vmul.f32 %v962, 1.442695
        %v1081 = vpow.pop %v1080
        %v1082 = vmul.f32 %v963, 1.442695
        %v1083 = vpow.pop %v1082
        %v1084 = vmul.f32 %v964, 1.442695
        %v1085 = vpow.pop %v1084
        %v1086 = vmul.f32 %v965, 1.442695
        %v1087 = vpow.pop %v1086
        %v1088 = vmul.f32 %v966, 1.442695
        %v1089 = vpow.pop %v1088
        %v1090 = vmul.f32 %v967, 1.442695
        %v1091 = vpow.pop %v1090
        %v1092 = vmul.f32 %v968, 1.442695
        %v1093 = vpow.pop %v1092
        %v1094 = vmul.f32 %v969, 1.442695
        %v1095 = vpow.pop %v1094
        %v1096 = vmul.f32 %v970, 1.442695
        %v1097 = vpow.pop %v1096
        %v1098 = vmul.f32 %v971, 1.442695
        %v1099 = vpow.pop %v1098
        %v1100 = vld [vmem:[#allocation4] sm:$0x3]
        %v1101 = vmul.f32 %v896, %v1100
        %v1102 = vadd.f32 %v973, %v977
        %v1103 = vadd.f32 %v1102, %v981
        %v1104 = vadd.f32 %v1103, %v985
        %v1105 = vadd.f32 %v1104, %v989
        %v1106 = vadd.f32 %v1105, %v993
        %v1107 = vadd.f32 %v1106, %v997
        %v1108 = vadd.f32 %v1107, %v1001
        %v1109 = vadd.f32 %v1108, %v1005
        %v1110 = vadd.f32 %v1109, %v1009
        %v1111 = vadd.f32 %v1110, %v1013
        %v1112 = vadd.f32 %v1111, %v1017
        %v1113 = vadd.f32 %v1112, %v1021
        %v1114 = vadd.f32 %v1113, %v1025
        %v1115 = vadd.f32 %v1114, %v1029
        %v1116 = vadd.f32 %v1115, %v1033
        %v1117 = vadd.f32 %v1116, %v1037
        %v1118 = vadd.f32 %v1117, %v1041
        %v1119 = vadd.f32 %v1118, %v1045
        %v1120 = vadd.f32 %v1119, %v1049
        %v1121 = vadd.f32 %v1120, %v1053
        %v1122 = vadd.f32 %v1121, %v1057
        %v1123 = vadd.f32 %v1122, %v1061
        %v1124 = vadd.f32 %v1123, %v1065
        %v1125 = vadd.f32 %v1124, %v1069
        %v1126 = vadd.f32 %v1125, %v1073
        %v1127 = vadd.f32 %v1126, %v1077
        %v1128 = vadd.f32 %v1127, %v1081
        %v1129 = vadd.f32 %v1128, %v1085
        %v1130 = vadd.f32 %v1129, %v1089
        %v1131 = vadd.f32 %v1130, %v1093
        %v1132 = vadd.f32 %v1131, %v1097
        %v1133 = vrot.slane %v1132, 4
        %v1134 = vadd.f32 %v1132, %v1133
        %v1135 = vrot.slane %v1134, 2
        %v1136 = vadd.f32 %v1134, %v1135
        %v1137 = vrot.slane %v1136, 1
        %v1138 = vadd.f32 %v1136, %v1137
        %v1139 = vadd.f32 %v975, %v979
        %v1140 = vadd.f32 %v1139, %v983
        %v1141 = vadd.f32 %v1140, %v987
        %v1142 = vadd.f32 %v1141, %v991
        %v1143 = vadd.f32 %v1142, %v995
        %v1144 = vadd.f32 %v1143, %v999
        %v1145 = vadd.f32 %v1144, %v1003
        %v1146 = vadd.f32 %v1145, %v1007
        %v1147 = vadd.f32 %v1146, %v1011
        %v1148 = vadd.f32 %v1147, %v1015
        %v1149 = vadd.f32 %v1148, %v1019
        %v1150 = vadd.f32 %v1149, %v1023
        %v1151 = vadd.f32 %v1150, %v1027
        %v1152 = vadd.f32 %v1151, %v1031
        %v1153 = vadd.f32 %v1152, %v1035
        %v1154 = vadd.f32 %v1153, %v1039
        %v1155 = vadd.f32 %v1154, %v1043
        %v1156 = vadd.f32 %v1155, %v1047
        %v1157 = vadd.f32 %v1156, %v1051
        %v1158 = vadd.f32 %v1157, %v1055
        %v1159 = vadd.f32 %v1158, %v1059
        %v1160 = vadd.f32 %v1159, %v1063
        %v1161 = vadd.f32 %v1160, %v1067
        %v1162 = vadd.f32 %v1161, %v1071
        %v1163 = vadd.f32 %v1162, %v1075
        %v1164 = vadd.f32 %v1163, %v1079
        %v1165 = vadd.f32 %v1164, %v1083
        %v1166 = vadd.f32 %v1165, %v1087
        %v1167 = vadd.f32 %v1166, %v1091
        %v1168 = vadd.f32 %v1167, %v1095
        %v1169 = vadd.f32 %v1168, %v1099
        %v1170 = vrot.slane %v1169, 4
        %v1171 = vadd.f32 %v1169, %v1170
        %v1172 = vrot.slane %v1171, 2
        %v1173 = vadd.f32 %v1171, %v1172
        %v1174 = vrot.slane %v1173, 1
        %v1175 = vadd.f32 %v1173, %v1174
        %v1178 = vcombine.low %v1138, %v1175
        %v1180 = vunpack.c.l.s4 1966171168
        %v1181 = vunpack.c.0.s8 %v1180
        %v1182 = vlaneseq
        %v1183 = vshrl.u32 %v1182, 7
        %v1184 = vsub.s32 %v1181, %v1183
        %v1185 = vrot.slane %v1178, %v1184
        %v1187 = vunpack.c.l.s4 1966171168
        %v1188 = vunpack.c.0.s8 %v1187
        %v1189 = vlaneseq
        %v1190 = vshrl.u32 %v1189, 7
        %v1191 = vsub.s32 %v1188, %v1190
        %v1192 = vrot.slane %v1185, %v1191
        %v1194 = vadd.f32 %v1101, %v1192
        %v1195 = vlaneseq
        %vm1196 = vcmp.ge.s32.totalorder %v1195, 0
        %vm1197 = vcmp.lt.s32.totalorder %v1195, 256
        %vm1198 = vmand %vm1196, %vm1197
        %1199 = vst.msk [vmem:[#allocation4] sm:$0x3] %vm1198, %v1194
        %v1200 = vpack.c.bf16 %v495, %v489
        %v1201 = vpack.c.bf16 %v497, %v491
        %v1202 = vpack.c.bf16 %v505, %v499
        %v1203 = vpack.c.bf16 %v507, %v501
        %v1204 = vpack.c.bf16 %v977, %v973
        %v1205 = vpack.c.bf16 %v979, %v975
        %v1206 = vpack.c.bf16 %v985, %v981
        %v1207 = vpack.c.bf16 %v987, %v983
        %v1208 = vpack.c.bf16 %v993, %v989
        %v1209 = vpack.c.bf16 %v995, %v991
        %v1210 = vpack.c.bf16 %v1001, %v997
        %v1211 = vpack.c.bf16 %v1003, %v999
        %v1212 = vpack.c.bf16 %v1009, %v1005
        %v1213 = vpack.c.bf16 %v1011, %v1007
        %v1214 = vpack.c.bf16 %v1017, %v1013
        %v1215 = vpack.c.bf16 %v1019, %v1015
        %v1216 = vpack.c.bf16 %v1025, %v1021
        %v1217 = vpack.c.bf16 %v1027, %v1023
        %v1218 = vpack.c.bf16 %v1033, %v1029
        %v1219 = vpack.c.bf16 %v1035, %v1031
        %v1220 = vpack.c.bf16 %v1041, %v1037
        %v1221 = vpack.c.bf16 %v1043, %v1039
        %v1222 = vpack.c.bf16 %v1049, %v1045
        %v1223 = vpack.c.bf16 %v1051, %v1047
        %v1224 = vpack.c.bf16 %v1057, %v1053
        %v1225 = vpack.c.bf16 %v1059, %v1055
        %v1226 = vpack.c.bf16 %v1065, %v1061
        %v1227 = vpack.c.bf16 %v1067, %v1063
        %v1228 = vpack.c.bf16 %v1073, %v1069
        %v1229 = vpack.c.bf16 %v1075, %v1071
        %v1230 = vpack.c.bf16 %v1081, %v1077
        %v1231 = vpack.c.bf16 %v1083, %v1079
        %v1232 = vpack.c.bf16 %v1089, %v1085
        %v1233 = vpack.c.bf16 %v1091, %v1087
        %v1234 = vpack.c.bf16 %v1097, %v1093
        %v1235 = vpack.c.bf16 %v1099, %v1095
        %1236 = vmatprep.subr.bf16.mxu0 %v1205
        %1237 = vmatpush1.bf16.msra.mxu0 %v1204
        %1238 = vmatprep.subr.bf16.mxu0 %v1207
        %1239 = vmatpush1.bf16.msra.mxu0 %v1206
        %1240 = vmatprep.subr.bf16.mxu0 %v1209
        %1241 = vmatpush1.bf16.msra.mxu0 %v1208
        %1242 = vmatprep.subr.bf16.mxu0 %v1211
        %1243 = vmatpush1.bf16.msra.mxu0 %v1210
        %1244 = vmatprep.subr.bf16.mxu0 %v1213
        %1245 = vmatpush1.bf16.msra.mxu0 %v1212
        %1246 = vmatprep.subr.bf16.mxu0 %v1215
        %1247 = vmatpush1.bf16.msra.mxu0 %v1214
        %1248 = vmatprep.subr.bf16.mxu0 %v1217
        %1249 = vmatpush1.bf16.msra.mxu0 %v1216
        %1250 = vmatprep.subr.bf16.mxu0 %v1219
        %1251 = vmatpush1.bf16.msra.mxu0 %v1218
        %1252 = vmatprep.subr.bf16.mxu0 %v1221
        %1253 = vmatpush1.bf16.msra.mxu0 %v1220
        %1254 = vmatprep.subr.bf16.mxu0 %v1223
        %1255 = vmatpush1.bf16.msra.mxu0 %v1222
        %1256 = vmatprep.subr.bf16.mxu0 %v1225
        %1257 = vmatpush1.bf16.msra.mxu0 %v1224
        %1258 = vmatprep.subr.bf16.mxu0 %v1227
        %1259 = vmatpush1.bf16.msra.mxu0 %v1226
        %1260 = vmatprep.subr.bf16.mxu0 %v1229
        %1261 = vmatpush1.bf16.msra.mxu0 %v1228
        %1262 = vmatprep.subr.bf16.mxu0 %v1231
        %1263 = vmatpush1.bf16.msra.mxu0 %v1230
        %1264 = vmatprep.subr.bf16.mxu0 %v1233
        %1265 = vmatpush1.bf16.msra.mxu0 %v1232
        %1266 = vmatprep.subr.bf16.mxu0 %v1235
        %1267 = vmatpush1.bf16.msra.mxu0 %v1234
        %1268 = vmatprep.mubr.bf16.mxu0 %v1201
        %1269 = vmatmul.mubr.bf16.gmra.mrb[0].mxu0 %v1200
        %v1270 = vpop.f32.mrb[0].mxu0
        %v1271 = vadd.f32 0.0, %v1270
        %v1272 = vpop.f32.mrb[0].mxu0
        %v1273 = vadd.f32 0.0, %v1272
        %v1274 = vpop.f32.mrb[0].mxu0
        %v1275 = vadd.f32 0.0, %v1274
        %v1276 = vpop.f32.mrb[0].mxu0
        %v1277 = vadd.f32 0.0, %v1276
        %1278 = vmatprep.mubr.bf16.mxu0 %v1203
        %1279 = vmatmul.mubr.bf16.gmra.mrb[0].mxu0 %v1202
        %v1280 = vpop.f32.mrb[0].mxu0
        %v1281 = vadd.f32 0.0, %v1280
        %v1282 = vpop.f32.mrb[0].mxu0
        %v1283 = vadd.f32 0.0, %v1282
        %v1284 = vpop.f32.mrb[0].mxu0
        %v1285 = vadd.f32 0.0, %v1284
        %v1286 = vpop.f32.mrb[0].mxu0
        %v1287 = vadd.f32 0.0, %v1286
        %1288 = vdwg.mxu0
        %v1289 = vld [vmem:[%s282] sm:$0xff]
        %v1290 = vld [vmem:[%s282 + $0x8] sm:$0xff]
        %v1291 = vld [vmem:[%s282 + $0x10] sm:$0xff]
        %v1292 = vld [vmem:[%s282 + $0x18] sm:$0xff]
        %v1293 = vld [vmem:[%s282 + $0x20] sm:$0xff]
        %v1294 = vld [vmem:[%s282 + $0x28] sm:$0xff]
        %v1295 = vld [vmem:[%s282 + $0x30] sm:$0xff]
        %v1296 = vld [vmem:[%s282 + $0x38] sm:$0xff]
        %v1298 = vlaneseq
        %v1299 = vshrl.u32 %v1298, 7
        %v1300 = vsub.s32 0, %v1299
        %v1301 = vrot.slane %v896, %v1300
        %v1302 = vlaneseq
        %v1303 = vshrl.u32 %v1302, 7
        %v1304 = vsub.s32 1, %v1303
        %v1305 = vrot.slane %v896, %v1304
        %v1308 = vmul.f32 %v1301, %v1289
        %v1309 = vmul.f32 %v1305, %v1290
        %v1310 = vmul.f32 %v1301, %v1291
        %v1311 = vmul.f32 %v1305, %v1292
        %v1312 = vmul.f32 %v1301, %v1293
        %v1313 = vmul.f32 %v1305, %v1294
        %v1314 = vmul.f32 %v1301, %v1295
        %v1315 = vmul.f32 %v1305, %v1296
        %v1316 = vadd.f32 %v1308, %v1271
        %v1317 = vadd.f32 %v1309, %v1273
        %v1318 = vadd.f32 %v1310, %v1275
        %v1319 = vadd.f32 %v1311, %v1277
        %v1320 = vadd.f32 %v1312, %v1281
        %v1321 = vadd.f32 %v1313, %v1283
        %v1322 = vadd.f32 %v1314, %v1285
        %v1323 = vadd.f32 %v1315, %v1287
        %1324 = vst [vmem:[%s282] sm:$0xff] %v1316
        %1325 = vst [vmem:[%s282 + $0x8] sm:$0xff] %v1317
        %1326 = vst [vmem:[%s282 + $0x10] sm:$0xff] %v1318
        %1327 = vst [vmem:[%s282 + $0x18] sm:$0xff] %v1319
        %1328 = vst [vmem:[%s282 + $0x20] sm:$0xff] %v1320
        %1329 = vst [vmem:[%s282 + $0x28] sm:$0xff] %v1321
        %1330 = vst [vmem:[%s282 + $0x30] sm:$0xff] %v1322
        %1331 = vst [vmem:[%s282 + $0x38] sm:$0xff] %v1323
        %1332 = vst.msk [vmem:[#allocation3] sm:$0x3] %vm1198, %v893
        // Predicated region
        $region53: #{tpu_custom_call.1} parent=43 // pred_check
          %p1333 = pneg %p284
        $region54: #{tpu_custom_call.1} parent=43 // pred_check_branch
          %1335 = sbr.rel (%p1333) target = $region56
        $region55: #{tpu_custom_call.1} parent=43 // pred_region
          %v1336 = vld [vmem:[#allocation4] sm:$0x3]
          %v1337 = vrcp.pop %v1336
          %s1338 = sld [smem:[#allocation5]]
          %v1339 = vld [vmem:[%s282] sm:$0xff]
          %v1340 = vld [vmem:[%s282 + $0x8] sm:$0xff]
          %v1341 = vld [vmem:[%s282 + $0x10] sm:$0xff]
          %v1342 = vld [vmem:[%s282 + $0x18] sm:$0xff]
          %v1343 = vld [vmem:[%s282 + $0x20] sm:$0xff]
          %v1344 = vld [vmem:[%s282 + $0x28] sm:$0xff]
          %v1345 = vld [vmem:[%s282 + $0x30] sm:$0xff]
          %v1346 = vld [vmem:[%s282 + $0x38] sm:$0xff]
          %v1348 = vlaneseq
          %v1349 = vshrl.u32 %v1348, 7
          %v1350 = vsub.s32 0, %v1349
          %v1351 = vrot.slane %v1337, %v1350
          %v1352 = vlaneseq
          %v1353 = vshrl.u32 %v1352, 7
          %v1354 = vsub.s32 1, %v1353
          %v1355 = vrot.slane %v1337, %v1354
          %v1358 = vmul.f32 %v1339, %v1351
          %v1359 = vmul.f32 %v1340, %v1355
          %v1360 = vmul.f32 %v1341, %v1351
          %v1361 = vmul.f32 %v1342, %v1355
          %v1362 = vmul.f32 %v1343, %v1351
          %v1363 = vmul.f32 %v1344, %v1355
          %v1364 = vmul.f32 %v1345, %v1351
          %v1365 = vmul.f32 %v1346, %v1355
          %v1366 = vstv %s1338
          %v1367 = vmul.f32 %v1366, %v1358
          %v1368 = vmul.f32 %v1366, %v1359
          %v1369 = vmul.f32 %v1366, %v1360
          %v1370 = vmul.f32 %v1366, %v1361
          %v1371 = vmul.f32 %v1366, %v1362
          %v1372 = vmul.f32 %v1366, %v1363
          %v1373 = vmul.f32 %v1366, %v1364
          %v1374 = vmul.f32 %v1366, %v1365
          %v1375 = vld [vmem:[%s254] sm:$0xff]
          %v1376 = vld [vmem:[%s254 + $0x8] sm:$0xff]
          %v1377 = vld [vmem:[%s254 + $0x10] sm:$0xff]
          %v1378 = vld [vmem:[%s254 + $0x18] sm:$0xff]
          %v1379 = vld [vmem:[%s254 + $0x20] sm:$0xff]
          %v1380 = vld [vmem:[%s254 + $0x28] sm:$0xff]
          %v1381 = vld [vmem:[%s254 + $0x30] sm:$0xff]
          %v1382 = vld [vmem:[%s254 + $0x38] sm:$0xff]
          %v1383 = vadd.f32 %v1367, %v1375
          %v1384 = vadd.f32 %v1368, %v1376
          %v1385 = vadd.f32 %v1369, %v1377
          %v1386 = vadd.f32 %v1370, %v1378
          %v1387 = vadd.f32 %v1371, %v1379
          %v1388 = vadd.f32 %v1372, %v1380
          %v1389 = vadd.f32 %v1373, %v1381
          %v1390 = vadd.f32 %v1374, %v1382
          %1391 = vst [vmem:[%s282] sm:$0xff] %v1383
          %1392 = vst [vmem:[%s282 + $0x8] sm:$0xff] %v1384
          %1393 = vst [vmem:[%s282 + $0x10] sm:$0xff] %v1385
          %1394 = vst [vmem:[%s282 + $0x18] sm:$0xff] %v1386
          %1395 = vst [vmem:[%s282 + $0x20] sm:$0xff] %v1387
          %1396 = vst [vmem:[%s282 + $0x28] sm:$0xff] %v1388
          %1397 = vst [vmem:[%s282 + $0x30] sm:$0xff] %v1389
          %1398 = vst [vmem:[%s282 + $0x38] sm:$0xff] %v1390
        $region56: #{tpu_custom_call.1} parent=43 // pred_fallthru
          _
        %s1399 = sand.u32 %s175, 1
        %s1400 = scalar_lea.sflag [#allocation8], %s1399
        %s1401 = sand.u32 %s175, 1
        %s1402 = smul.addr %s1401, 64
        %s1403 = scalar_lea.vmem [#allocation9], %s1402
        // Predicated region
        $region57: #{tpu_custom_call.1} parent=43 // pred_check
          %p1404 = pneg %p185
        $region58: #{tpu_custom_call.1} parent=43 // pred_check_branch
          %1406 = sbr.rel (%p1404) target = $region60
        $region59: #{tpu_custom_call.1} parent=43 // pred_region
          %s1408 = ssub.s32 1024, 1024
          %1409 = vsyncadd %s1400, %s1408
          %s1410 = smul.addr %s28, 8
          %s1411 = smul.addr %s1410, 128
          %s1412 = scalar_lea.hbm %s6, %s1411
          %s1413 = sshll.u32 %s1403, 4
          %s1414 = int_to_ptr.vmem [resolvable:$true] %s1413
          %1419 = dma.vmem_to_hbm [thread:$0]  %s1414, 1024, %s1412, %s1400, 256, 256, 16
        $region60: #{tpu_custom_call.1} parent=43 // pred_fallthru
          _
      $region44: #{tpu_custom_call.1} parent=5 // pred_fallthru
        _
      %p1420 = scmp.le.s32.totalorder 2, %s19
      // Predicated region
      $region61: #{tpu_custom_call.1} parent=5 // pred_check
        %p1421 = pneg %p1420
      $region62: #{tpu_custom_call.1} parent=5 // pred_check_branch
        %1423 = sbr.rel (%p1421) target = $region64
      $region63: #{tpu_custom_call.1} parent=5 // pred_region
        %s1424 = ssub.s32 %s19, 2
        // Predicated region
        $region65: #{tpu_custom_call.1} parent=63 // pred_check
          %p1425 = pneg %p191
        $region66: #{tpu_custom_call.1} parent=63 // pred_check_branch
          %1427 = sbr.rel (%p1425) target = $region68
        $region67: #{tpu_custom_call.1} parent=63 // pred_region
          %s1428 = sand.u32 %s176, 1
          %s1429 = scalar_lea.sflag [#allocation8], %s1428
          %s1430 = sand.u32 %s176, 1
          %s1431 = smul.addr %s1430, 64
          %s1432 = scalar_lea.vmem [#allocation9], %s1431
          %1433 = dma.done %s1429, 1024
        $region68: #{tpu_custom_call.1} parent=63 // pred_fallthru
          _
      $region64: #{tpu_custom_call.1} parent=5 // pred_fallthru
        _
    $region6: #{tpu_custom_call.1} parent=1 // loop_footer
      %s23 = sadd.s32 1, %s19
    $region7: #{tpu_custom_call.1} parent=1 // loop_footer_branch
      %18 = sbr.rel target = $region3
    $region8: #{tpu_custom_call.1} parent=1 // loop_exit
      _
    %1434 = vsyncpa [#allocation7], 1
    %s1435 = scalar_lea.sflag [#allocation7], 1
    %1436 = vsyncpa %s1435, 1
    %1437 = vsyncpa [#allocation8], 1
    %s1438 = scalar_lea.sflag [#allocation8], 1
    %1439 = vsyncpa %s1438, 1

</llo_original>
